<compile_context>
chip_gen: v7x
topology: tpu7x:2x2x1
jax: 0.10.0
libtpu: 0.0.40
codegen_flags: <defaults>
</compile_context>

<pallas_src>
import math
import functools

import jax
import jax.numpy as jnp
from jax.experimental import pallas as pl
from jax.experimental.pallas import tpu as pltpu


def _mha_kernel(q_ref, k_ref, v_ref, mask_ref,
                wq_ref, bq_ref, wk_ref, bk_ref, wv_ref, bv_ref,
                wo_ref, bo_ref, o_ref, *, heads, d_k, batch_tile, seq):
    D = heads * d_k
    Bt, S, H = batch_tile, seq, heads

    # Collapse the folded batch into rows: (Bt, S, D) -> (Bt*S, D).  Leading-dim
    # collapse only (lane dim unchanged) -> no relayout.  Cast activations to
    # bf16 for the MXU; accumulation stays f32 via preferred_element_type.
    q_in = q_ref[...].reshape(Bt * S, D).astype(jnp.bfloat16)
    k_in = k_ref[...].reshape(Bt * S, D).astype(jnp.bfloat16)
    v_in = v_ref[...].reshape(Bt * S, D).astype(jnp.bfloat16)

    # Q/K/V projections on all Bt*S rows at once (weights pre-transposed to
    # (in, out) in the wrapper; the 1/sqrt(d_k) scale is folded into wq/bq).
    q_p = (jnp.dot(q_in, wq_ref[...], preferred_element_type=jnp.float32)
           + bq_ref[...]).astype(jnp.bfloat16)
    k_p = (jnp.dot(k_in, wk_ref[...], preferred_element_type=jnp.float32)
           + bk_ref[...]).astype(jnp.bfloat16)
    v_p = (jnp.dot(v_in, wv_ref[...], preferred_element_type=jnp.float32)
           + bv_ref[...]).astype(jnp.bfloat16)

    mask_vals = mask_ref[...]                       # (Bt, S, S), 0 = drop

    # Per-(batch, head) QK^T on the MXU.  dot_general contracts the last dims
    # of both operands, so K is consumed as a transposed MXU operand -- no
    # explicit XLU transpose.
    dn = (((1,), (1,)), ((), ()))
    score_tiles = []
    mask_tiles = []
    for b in range(Bt):                              # tiny, unrolled
        rows = slice(b * S, (b + 1) * S)
        m_b = mask_vals[b]                           # (S, S)
        for h in range(H):
            cols = slice(h * d_k, (h + 1) * d_k)
            score_tiles.append(jax.lax.dot_general(
                q_p[rows, cols], k_p[rows, cols], dimension_numbers=dn,
                preferred_element_type=jnp.float32))
            mask_tiles.append(m_b)

    # Batch the element-wise softmax work across all Bt*H heads: ONE
    # where/max/exp/sum/reciprocal/multiply over a (Bt*H*S, S) slab instead of
    # Bt*H tiny (S, S) passes.
    s = jnp.concatenate(score_tiles, axis=0)         # (Bt*H*S, S) f32
    m_all = jnp.concatenate(mask_tiles, axis=0)      # (Bt*H*S, S)
    s = jnp.where(m_all == 0, -1e9, s)               # masked_fill(mask == 0)
    s_max = s.max(axis=-1, keepdims=True)
    p = jnp.exp(s - s_max)
    # Exact reciprocal: approx=True introduced ~1e-2 error in the attention
    # probabilities, and the EUP slot is not the bottleneck here.
    p = p * pl.reciprocal(p.sum(axis=-1, keepdims=True), approx=False)
    p = p.astype(jnp.bfloat16)
    # TODO(synk): training-time dropout on attention probabilities not implemented.

    # Per-(batch, head) P @ V on the MXU; heads re-merged along lanes, batches
    # along sublanes (matches the PyTorch transpose -> contiguous -> view).
    batch_rows = []
    for b in range(Bt):
        rows = slice(b * S, (b + 1) * S)
        head_outs = []
        for h in range(H):
            t = b * H + h
            p_bh = p[t * S:(t + 1) * S, :]                       # (S, S)
            v_bh = v_p[rows, h * d_k:(h + 1) * d_k]              # (S, d_k)
            head_outs.append(jnp.dot(p_bh, v_bh,
                                     preferred_element_type=jnp.float32))
        batch_rows.append(jnp.concatenate(head_outs, axis=-1))   # (S, D)
    concat = jnp.concatenate(batch_rows, axis=0)                 # (Bt*S, D)

    out = jnp.dot(concat.astype(jnp.bfloat16), wo_ref[...],
                  preferred_element_type=jnp.float32) + bo_ref[...]
    o_ref[...] = out.reshape(Bt, S, D).astype(o_ref.dtype)


def _default_batch_tile(B):
    """v7x has 2 TensorCores/chip -> keep >= 2 parallel grid steps so both get
    work; single-TC v5e/v6e -> fold the whole batch into one block so the
    per-grid-step overhead is paid once and the projections see B*S rows."""
    try:
        two_tc = "v7" in jax.devices()[0].device_kind.lower()
    except Exception:  # pragma: no cover - defensive
        two_tc = False
    if two_tc and B >= 2 and B % 2 == 0:
        return B // 2
    return B


def multi_head_attention(q, k, v, mask, params, heads, batch_tile=None):
    """q, k, v: [B, S, D]; mask: [B, S, S] (nonzero keep / 0 drop)."""
    B, S, D = q.shape
    d_k = D // heads
    wq, bq, wk, bk, wv, bv, wo, bo = params
    scale = 1.0 / math.sqrt(d_k)

    # --- Trace-time parameter plumbing (grid-invariant, done once) ----------
    # Pre-transpose to (in, out), fold the 1/sqrt(d_k) score scale into the Q
    # projection, and feed the MXU bf16 weights (biases stay f32 and are added
    # to the f32 accumulator).
    wq_t = (wq.T * scale).astype(jnp.bfloat16)
    wk_t = wk.T.astype(jnp.bfloat16)
    wv_t = wv.T.astype(jnp.bfloat16)
    wo_t = wo.T.astype(jnp.bfloat16)
    bq_r = (bq * scale).reshape(1, D).astype(jnp.float32)
    bk_r = bk.reshape(1, D).astype(jnp.float32)
    bv_r = bv.reshape(1, D).astype(jnp.float32)
    bo_r = bo.reshape(1, D).astype(jnp.float32)

    if batch_tile is None:
        batch_tile = _default_batch_tile(B)
    assert B % batch_tile == 0, "batch_tile must divide the batch size"
    num_blocks = B // batch_tile

    kernel = functools.partial(_mha_kernel, heads=heads, d_k=d_k,
                               batch_tile=batch_tile, seq=S)
    bblk = lambda i: (i, 0, 0)
    full2d = lambda i: (0, 0)

    return pl.pallas_call(
        kernel,
        out_shape=jax.ShapeDtypeStruct((B, S, D), q.dtype),
        grid_spec=pltpu.PrefetchScalarGridSpec(
            num_scalar_prefetch=0,
            grid=(num_blocks,),
            in_specs=[
                pl.BlockSpec((batch_tile, S, D), bblk),   # q
                pl.BlockSpec((batch_tile, S, D), bblk),   # k
                pl.BlockSpec((batch_tile, S, D), bblk),   # v
                pl.BlockSpec((batch_tile, S, S), bblk),   # mask (as given)
                pl.BlockSpec((D, D), full2d),             # Wq (pre-T, scaled)
                pl.BlockSpec((1, D), full2d),             # bq (scaled)
                pl.BlockSpec((D, D), full2d),             # Wk
                pl.BlockSpec((1, D), full2d),             # bk
                pl.BlockSpec((D, D), full2d),             # Wv
                pl.BlockSpec((1, D), full2d),             # bv
                pl.BlockSpec((D, D), full2d),             # Wo
                pl.BlockSpec((1, D), full2d),             # bo
            ],
            out_specs=pl.BlockSpec((batch_tile, S, D), bblk),
        ),
        compiler_params=pltpu.CompilerParams(
            dimension_semantics=("parallel",)),
    )(q, k, v, mask, wq_t, bq_r, wk_t, bk_r, wv_t, bv_r, wo_t, bo_r)


def _reference(q, k, v, mask, params, heads):
    """Pure-JAX f32 reference mirroring the PyTorch forward (dropout = identity)."""
    B, S, D = q.shape
    d_k = D // heads
    wq, bq, wk, bk, wv, bv, wo, bo = params
    Q = (q @ wq.T + bq).reshape(B, S, heads, d_k).transpose(0, 2, 1, 3)
    K = (k @ wk.T + bk).reshape(B, S, heads, d_k).transpose(0, 2, 1, 3)
    V = (v @ wv.T + bv).reshape(B, S, heads, d_k).transpose(0, 2, 1, 3)
    scores = jnp.einsum('bhqd,bhkd->bhqk', Q, K) / math.sqrt(d_k)
    scores = jnp.where(mask[:, None, :, :] == 0, -1e9, scores)
    p = jax.nn.softmax(scores, axis=-1)
    attn = jnp.einsum('bhqk,bhkd->bhqd', p, V)
    concat = attn.transpose(0, 2, 1, 3).reshape(B, S, D)
    return concat @ wo.T + bo


if __name__ == "__main__":
    B, S, D, H = 2, 8, 32, 4

    key = jax.random.PRNGKey(0)
    keys = jax.random.split(key, 12)

    # Deterministic parameter init (PyTorch nn.Linear-style uniform bound).
    bound = 1.0 / math.sqrt(D)
    def u(kk, shape):
        return jax.random.uniform(kk, shape, jnp.float32,
                                  minval=-bound, maxval=bound)

    params = (
        u(keys[0], (D, D)), u(keys[1], (D,)),   # q_linear
        u(keys[2], (D, D)), u(keys[3], (D,)),   # k_linear
        u(keys[4], (D, D)), u(keys[5], (D,)),   # v_linear
        u(keys[6], (D, D)), u(keys[7], (D,)),   # out
    )

    q = jax.random.normal(keys[8], (B, S, D), jnp.float32)
    k = jax.random.normal(keys[9], (B, S, D), jnp.float32)
    v = jax.random.normal(keys[10], (B, S, D), jnp.float32)
    # Causal-ish mask to exercise the masked_fill path.
    mask = jnp.tril(jnp.ones((S, S), jnp.float32))[None].repeat(B, axis=0)

    out = multi_head_attention(q, k, v, mask, params, H)
    out = jax.block_until_ready(out)

    ref = _reference(q, k, v, mask, params, H)
    assert out.shape == (B, S, D)
    # Tolerance accounts for bf16 MXU inputs (f32 accumulation, f32 softmax);
    # semantic bugs produce errors orders of magnitude larger than this.
    assert jnp.allclose(out, ref, atol=3e-2, rtol=3e-2), "mismatch vs reference"

    print("KERNEL_OK")
</pallas_src>

<mosaic_0001>
module attributes {stable_mosaic.version = 11 : i64} {
  func.func @_mha_kernel(%arg0: i32, %arg1: memref<2x8x32xf32, #tpu.memory_space<vmem>>, %arg2: memref<2x8x32xf32, #tpu.memory_space<vmem>>, %arg3: memref<2x8x32xf32, #tpu.memory_space<vmem>>, %arg4: memref<2x8x8xf32, #tpu.memory_space<vmem>>, %arg5: memref<32x32xbf16, #tpu.memory_space<vmem>>, %arg6: memref<1x32xf32, #tpu.memory_space<vmem>>, %arg7: memref<32x32xbf16, #tpu.memory_space<vmem>>, %arg8: memref<1x32xf32, #tpu.memory_space<vmem>>, %arg9: memref<32x32xbf16, #tpu.memory_space<vmem>>, %arg10: memref<1x32xf32, #tpu.memory_space<vmem>>, %arg11: memref<32x32xbf16, #tpu.memory_space<vmem>>, %arg12: memref<1x32xf32, #tpu.memory_space<vmem>>, %arg13: memref<2x8x32xf32, #tpu.memory_space<vmem>>) attributes {dimension_semantics = [#tpu.dimension_semantics<parallel>], iteration_bounds = array<i64: 1>, scalar_prefetch = 0 : i64, scratch_operands = 0 : i64, tpu.core_type = #tpu.core_type<tc>, window_params = [{transform_indices = @transform_0, window_bounds = array<i64: 2, 8, 32>}, {transform_indices = @transform_1, window_bounds = array<i64: 2, 8, 32>}, {transform_indices = @transform_2, window_bounds = array<i64: 2, 8, 32>}, {transform_indices = @transform_3, window_bounds = array<i64: 2, 8, 8>}, {pipeline_mode = #tpu.pipeline_mode<synchronous>, transform_indices = @transform_4, window_bounds = array<i64: 32, 32>}, {pipeline_mode = #tpu.pipeline_mode<synchronous>, transform_indices = @transform_5, window_bounds = array<i64: 1, 32>}, {pipeline_mode = #tpu.pipeline_mode<synchronous>, transform_indices = @transform_6, window_bounds = array<i64: 32, 32>}, {pipeline_mode = #tpu.pipeline_mode<synchronous>, transform_indices = @transform_7, window_bounds = array<i64: 1, 32>}, {pipeline_mode = #tpu.pipeline_mode<synchronous>, transform_indices = @transform_8, window_bounds = array<i64: 32, 32>}, {pipeline_mode = #tpu.pipeline_mode<synchronous>, transform_indices = @transform_9, window_bounds = array<i64: 1, 32>}, {pipeline_mode = #tpu.pipeline_mode<synchronous>, transform_indices = @transform_10, window_bounds = array<i64: 32, 32>}, {pipeline_mode = #tpu.pipeline_mode<synchronous>, transform_indices = @transform_11, window_bounds = array<i64: 1, 32>}, {transform_indices = @transform_12, window_bounds = array<i64: 2, 8, 32>}]} {
    %c0 = arith.constant 0 : index
    %c0_0 = arith.constant 0 : index
    %c0_1 = arith.constant 0 : index
    %0 = vector.load %arg1[%c0, %c0_0, %c0_1] : memref<2x8x32xf32, #tpu.memory_space<vmem>>, vector<2x8x32xf32>
    %1 = vector.shape_cast %0 : vector<2x8x32xf32> to vector<16x32xf32>
    %2 = arith.truncf %1 : vector<16x32xf32> to vector<16x32xbf16>
    %c0_2 = arith.constant 0 : index
    %c0_3 = arith.constant 0 : index
    %c0_4 = arith.constant 0 : index
    %3 = vector.load %arg2[%c0_2, %c0_3, %c0_4] : memref<2x8x32xf32, #tpu.memory_space<vmem>>, vector<2x8x32xf32>
    %4 = vector.shape_cast %3 : vector<2x8x32xf32> to vector<16x32xf32>
    %5 = arith.truncf %4 : vector<16x32xf32> to vector<16x32xbf16>
    %c0_5 = arith.constant 0 : index
    %c0_6 = arith.constant 0 : index
    %c0_7 = arith.constant 0 : index
    %6 = vector.load %arg3[%c0_5, %c0_6, %c0_7] : memref<2x8x32xf32, #tpu.memory_space<vmem>>, vector<2x8x32xf32>
    %7 = vector.shape_cast %6 : vector<2x8x32xf32> to vector<16x32xf32>
    %8 = arith.truncf %7 : vector<16x32xf32> to vector<16x32xbf16>
    %c0_8 = arith.constant 0 : index
    %c0_9 = arith.constant 0 : index
    %9 = vector.load %arg5[%c0_8, %c0_9] : memref<32x32xbf16, #tpu.memory_space<vmem>>, vector<32x32xbf16>
    %cst = arith.constant dense<0.000000e+00> : vector<16x32xf32>
    %10 = tpu.matmul %2, %9, %cst {dimension_numbers = #tpu.dot_dimension_numbers<[1], [0], [0], [1], [0, 0, 1, 1], [], []>} : vector<16x32xbf16>, vector<32x32xbf16>, vector<16x32xf32> -> vector<16x32xf32>
    %c0_10 = arith.constant 0 : index
    %c0_11 = arith.constant 0 : index
    %11 = vector.load %arg6[%c0_10, %c0_11] : memref<1x32xf32, #tpu.memory_space<vmem>>, vector<1x32xf32>
    %12 = vector.broadcast %11 : vector<1x32xf32> to vector<16x32xf32>
    %13 = arith.addf %10, %12 : vector<16x32xf32>
    %14 = arith.truncf %13 : vector<16x32xf32> to vector<16x32xbf16>
    %c0_12 = arith.constant 0 : index
    %c0_13 = arith.constant 0 : index
    %15 = vector.load %arg7[%c0_12, %c0_13] : memref<32x32xbf16, #tpu.memory_space<vmem>>, vector<32x32xbf16>
    %cst_14 = arith.constant dense<0.000000e+00> : vector<16x32xf32>
    %16 = tpu.matmul %5, %15, %cst_14 {dimension_numbers = #tpu.dot_dimension_numbers<[1], [0], [0], [1], [0, 0, 1, 1], [], []>} : vector<16x32xbf16>, vector<32x32xbf16>, vector<16x32xf32> -> vector<16x32xf32>
    %c0_15 = arith.constant 0 : index
    %c0_16 = arith.constant 0 : index
    %17 = vector.load %arg8[%c0_15, %c0_16] : memref<1x32xf32, #tpu.memory_space<vmem>>, vector<1x32xf32>
    %18 = vector.broadcast %17 : vector<1x32xf32> to vector<16x32xf32>
    %19 = arith.addf %16, %18 : vector<16x32xf32>
    %20 = arith.truncf %19 : vector<16x32xf32> to vector<16x32xbf16>
    %c0_17 = arith.constant 0 : index
    %c0_18 = arith.constant 0 : index
    %21 = vector.load %arg9[%c0_17, %c0_18] : memref<32x32xbf16, #tpu.memory_space<vmem>>, vector<32x32xbf16>
    %cst_19 = arith.constant dense<0.000000e+00> : vector<16x32xf32>
    %22 = tpu.matmul %8, %21, %cst_19 {dimension_numbers = #tpu.dot_dimension_numbers<[1], [0], [0], [1], [0, 0, 1, 1], [], []>} : vector<16x32xbf16>, vector<32x32xbf16>, vector<16x32xf32> -> vector<16x32xf32>
    %c0_20 = arith.constant 0 : index
    %c0_21 = arith.constant 0 : index
    %23 = vector.load %arg10[%c0_20, %c0_21] : memref<1x32xf32, #tpu.memory_space<vmem>>, vector<1x32xf32>
    %24 = vector.broadcast %23 : vector<1x32xf32> to vector<16x32xf32>
    %25 = arith.addf %22, %24 : vector<16x32xf32>
    %26 = arith.truncf %25 : vector<16x32xf32> to vector<16x32xbf16>
    %c0_22 = arith.constant 0 : index
    %c0_23 = arith.constant 0 : index
    %c0_24 = arith.constant 0 : index
    %27 = vector.load %arg4[%c0_22, %c0_23, %c0_24] : memref<2x8x8xf32, #tpu.memory_space<vmem>>, vector<2x8x8xf32>
    %28 = vector.extract_strided_slice %27 {offsets = [0, 0, 0], sizes = [1, 8, 8], strides = [1, 1, 1]} : vector<2x8x8xf32> to vector<1x8x8xf32>
    %29 = vector.shape_cast %28 : vector<1x8x8xf32> to vector<8x8xf32>
    %30 = vector.extract_strided_slice %14 {offsets = [0, 0], sizes = [8, 8], strides = [1, 1]} : vector<16x32xbf16> to vector<8x8xbf16>
    %31 = vector.extract_strided_slice %20 {offsets = [0, 0], sizes = [8, 8], strides = [1, 1]} : vector<16x32xbf16> to vector<8x8xbf16>
    %cst_25 = arith.constant dense<0.000000e+00> : vector<8x8xf32>
    %32 = tpu.matmul %30, %31, %cst_25 {dimension_numbers = #tpu.dot_dimension_numbers<[1], [1], [0], [0], [0, 0, 1, 0], [], []>} : vector<8x8xbf16>, vector<8x8xbf16>, vector<8x8xf32> -> vector<8x8xf32>
    %33 = vector.extract_strided_slice %14 {offsets = [0, 8], sizes = [8, 8], strides = [1, 1]} : vector<16x32xbf16> to vector<8x8xbf16>
    %34 = vector.extract_strided_slice %20 {offsets = [0, 8], sizes = [8, 8], strides = [1, 1]} : vector<16x32xbf16> to vector<8x8xbf16>
    %cst_26 = arith.constant dense<0.000000e+00> : vector<8x8xf32>
    %35 = tpu.matmul %33, %34, %cst_26 {dimension_numbers = #tpu.dot_dimension_numbers<[1], [1], [0], [0], [0, 0, 1, 0], [], []>} : vector<8x8xbf16>, vector<8x8xbf16>, vector<8x8xf32> -> vector<8x8xf32>
    %36 = vector.extract_strided_slice %14 {offsets = [0, 16], sizes = [8, 8], strides = [1, 1]} : vector<16x32xbf16> to vector<8x8xbf16>
    %37 = vector.extract_strided_slice %20 {offsets = [0, 16], sizes = [8, 8], strides = [1, 1]} : vector<16x32xbf16> to vector<8x8xbf16>
    %cst_27 = arith.constant dense<0.000000e+00> : vector<8x8xf32>
    %38 = tpu.matmul %36, %37, %cst_27 {dimension_numbers = #tpu.dot_dimension_numbers<[1], [1], [0], [0], [0, 0, 1, 0], [], []>} : vector<8x8xbf16>, vector<8x8xbf16>, vector<8x8xf32> -> vector<8x8xf32>
    %39 = vector.extract_strided_slice %14 {offsets = [0, 24], sizes = [8, 8], strides = [1, 1]} : vector<16x32xbf16> to vector<8x8xbf16>
    %40 = vector.extract_strided_slice %20 {offsets = [0, 24], sizes = [8, 8], strides = [1, 1]} : vector<16x32xbf16> to vector<8x8xbf16>
    %cst_28 = arith.constant dense<0.000000e+00> : vector<8x8xf32>
    %41 = tpu.matmul %39, %40, %cst_28 {dimension_numbers = #tpu.dot_dimension_numbers<[1], [1], [0], [0], [0, 0, 1, 0], [], []>} : vector<8x8xbf16>, vector<8x8xbf16>, vector<8x8xf32> -> vector<8x8xf32>
    %42 = vector.extract_strided_slice %27 {offsets = [1, 0, 0], sizes = [1, 8, 8], strides = [1, 1, 1]} : vector<2x8x8xf32> to vector<1x8x8xf32>
    %43 = vector.shape_cast %42 : vector<1x8x8xf32> to vector<8x8xf32>
    %44 = vector.extract_strided_slice %14 {offsets = [8, 0], sizes = [8, 8], strides = [1, 1]} : vector<16x32xbf16> to vector<8x8xbf16>
    %45 = vector.extract_strided_slice %20 {offsets = [8, 0], sizes = [8, 8], strides = [1, 1]} : vector<16x32xbf16> to vector<8x8xbf16>
    %cst_29 = arith.constant dense<0.000000e+00> : vector<8x8xf32>
    %46 = tpu.matmul %44, %45, %cst_29 {dimension_numbers = #tpu.dot_dimension_numbers<[1], [1], [0], [0], [0, 0, 1, 0], [], []>} : vector<8x8xbf16>, vector<8x8xbf16>, vector<8x8xf32> -> vector<8x8xf32>
    %47 = vector.extract_strided_slice %14 {offsets = [8, 8], sizes = [8, 8], strides = [1, 1]} : vector<16x32xbf16> to vector<8x8xbf16>
    %48 = vector.extract_strided_slice %20 {offsets = [8, 8], sizes = [8, 8], strides = [1, 1]} : vector<16x32xbf16> to vector<8x8xbf16>
    %cst_30 = arith.constant dense<0.000000e+00> : vector<8x8xf32>
    %49 = tpu.matmul %47, %48, %cst_30 {dimension_numbers = #tpu.dot_dimension_numbers<[1], [1], [0], [0], [0, 0, 1, 0], [], []>} : vector<8x8xbf16>, vector<8x8xbf16>, vector<8x8xf32> -> vector<8x8xf32>
    %50 = vector.extract_strided_slice %14 {offsets = [8, 16], sizes = [8, 8], strides = [1, 1]} : vector<16x32xbf16> to vector<8x8xbf16>
    %51 = vector.extract_strided_slice %20 {offsets = [8, 16], sizes = [8, 8], strides = [1, 1]} : vector<16x32xbf16> to vector<8x8xbf16>
    %cst_31 = arith.constant dense<0.000000e+00> : vector<8x8xf32>
    %52 = tpu.matmul %50, %51, %cst_31 {dimension_numbers = #tpu.dot_dimension_numbers<[1], [1], [0], [0], [0, 0, 1, 0], [], []>} : vector<8x8xbf16>, vector<8x8xbf16>, vector<8x8xf32> -> vector<8x8xf32>
    %53 = vector.extract_strided_slice %14 {offsets = [8, 24], sizes = [8, 8], strides = [1, 1]} : vector<16x32xbf16> to vector<8x8xbf16>
    %54 = vector.extract_strided_slice %20 {offsets = [8, 24], sizes = [8, 8], strides = [1, 1]} : vector<16x32xbf16> to vector<8x8xbf16>
    %cst_32 = arith.constant dense<0.000000e+00> : vector<8x8xf32>
    %55 = tpu.matmul %53, %54, %cst_32 {dimension_numbers = #tpu.dot_dimension_numbers<[1], [1], [0], [0], [0, 0, 1, 0], [], []>} : vector<8x8xbf16>, vector<8x8xbf16>, vector<8x8xf32> -> vector<8x8xf32>
    %56 = tpu.concatenate %32, %35, %38, %41, %46, %49, %52, %55 in 0 : vector<8x8xf32>, vector<8x8xf32>, vector<8x8xf32>, vector<8x8xf32>, vector<8x8xf32>, vector<8x8xf32>, vector<8x8xf32>, vector<8x8xf32> -> vector<64x8xf32>
    %57 = tpu.concatenate %29, %29, %29, %29, %43, %43, %43, %43 in 0 : vector<8x8xf32>, vector<8x8xf32>, vector<8x8xf32>, vector<8x8xf32>, vector<8x8xf32>, vector<8x8xf32>, vector<8x8xf32>, vector<8x8xf32> -> vector<64x8xf32>
    %cst_33 = arith.constant 0.000000e+00 : f32
    %58 = vector.broadcast %cst_33 : f32 to vector<64x8xf32>
    %59 = arith.cmpf oeq, %57, %58 : vector<64x8xf32>
    %cst_34 = arith.constant -1.000000e+09 : f32
    %60 = vector.broadcast %cst_34 : f32 to vector<64x8xf32>
    %61 = arith.select %59, %60, %56 : vector<64x8xi1>, vector<64x8xf32>
    %cst_35 = arith.constant dense<0xFF800000> : vector<64xf32>
    %62 = vector.multi_reduction <maximumf>, %61, %cst_35 [1] : vector<64x8xf32> to vector<64xf32>
    %63 = vector.shape_cast %62 : vector<64xf32> to vector<64x1xf32>
    %64 = vector.broadcast %63 : vector<64x1xf32> to vector<64x8xf32>
    %65 = arith.subf %61, %64 : vector<64x8xf32>
    %66 = math.exp %65 : vector<64x8xf32>
    %cst_36 = arith.constant dense<0.000000e+00> : vector<64xf32>
    %67 = vector.multi_reduction <add>, %66, %cst_36 [1] : vector<64x8xf32> to vector<64xf32>
    %68 = vector.shape_cast %67 : vector<64xf32> to vector<64x1xf32>
    %69 = tpu.reciprocal %68 : vector<64x1xf32> -> vector<64x1xf32>
    %70 = vector.broadcast %69 : vector<64x1xf32> to vector<64x8xf32>
    %71 = arith.mulf %66, %70 : vector<64x8xf32>
    %72 = arith.truncf %71 : vector<64x8xf32> to vector<64x8xbf16>
    %73 = vector.extract_strided_slice %72 {offsets = [0, 0], sizes = [8, 8], strides = [1, 1]} : vector<64x8xbf16> to vector<8x8xbf16>
    %74 = vector.extract_strided_slice %26 {offsets = [0, 0], sizes = [8, 8], strides = [1, 1]} : vector<16x32xbf16> to vector<8x8xbf16>
    %cst_37 = arith.constant dense<0.000000e+00> : vector<8x8xf32>
    %75 = tpu.matmul %73, %74, %cst_37 {dimension_numbers = #tpu.dot_dimension_numbers<[1], [0], [0], [1], [0, 0, 1, 1], [], []>} : vector<8x8xbf16>, vector<8x8xbf16>, vector<8x8xf32> -> vector<8x8xf32>
    %76 = vector.extract_strided_slice %72 {offsets = [8, 0], sizes = [8, 8], strides = [1, 1]} : vector<64x8xbf16> to vector<8x8xbf16>
    %77 = vector.extract_strided_slice %26 {offsets = [0, 8], sizes = [8, 8], strides = [1, 1]} : vector<16x32xbf16> to vector<8x8xbf16>
    %cst_38 = arith.constant dense<0.000000e+00> : vector<8x8xf32>
    %78 = tpu.matmul %76, %77, %cst_38 {dimension_numbers = #tpu.dot_dimension_numbers<[1], [0], [0], [1], [0, 0, 1, 1], [], []>} : vector<8x8xbf16>, vector<8x8xbf16>, vector<8x8xf32> -> vector<8x8xf32>
    %79 = vector.extract_strided_slice %72 {offsets = [16, 0], sizes = [8, 8], strides = [1, 1]} : vector<64x8xbf16> to vector<8x8xbf16>
    %80 = vector.extract_strided_slice %26 {offsets = [0, 16], sizes = [8, 8], strides = [1, 1]} : vector<16x32xbf16> to vector<8x8xbf16>
    %cst_39 = arith.constant dense<0.000000e+00> : vector<8x8xf32>
    %81 = tpu.matmul %79, %80, %cst_39 {dimension_numbers = #tpu.dot_dimension_numbers<[1], [0], [0], [1], [0, 0, 1, 1], [], []>} : vector<8x8xbf16>, vector<8x8xbf16>, vector<8x8xf32> -> vector<8x8xf32>
    %82 = vector.extract_strided_slice %72 {offsets = [24, 0], sizes = [8, 8], strides = [1, 1]} : vector<64x8xbf16> to vector<8x8xbf16>
    %83 = vector.extract_strided_slice %26 {offsets = [0, 24], sizes = [8, 8], strides = [1, 1]} : vector<16x32xbf16> to vector<8x8xbf16>
    %cst_40 = arith.constant dense<0.000000e+00> : vector<8x8xf32>
    %84 = tpu.matmul %82, %83, %cst_40 {dimension_numbers = #tpu.dot_dimension_numbers<[1], [0], [0], [1], [0, 0, 1, 1], [], []>} : vector<8x8xbf16>, vector<8x8xbf16>, vector<8x8xf32> -> vector<8x8xf32>
    %85 = tpu.concatenate %75, %78, %81, %84 in 1 : vector<8x8xf32>, vector<8x8xf32>, vector<8x8xf32>, vector<8x8xf32> -> vector<8x32xf32>
    %86 = vector.extract_strided_slice %72 {offsets = [32, 0], sizes = [8, 8], strides = [1, 1]} : vector<64x8xbf16> to vector<8x8xbf16>
    %87 = vector.extract_strided_slice %26 {offsets = [8, 0], sizes = [8, 8], strides = [1, 1]} : vector<16x32xbf16> to vector<8x8xbf16>
    %cst_41 = arith.constant dense<0.000000e+00> : vector<8x8xf32>
    %88 = tpu.matmul %86, %87, %cst_41 {dimension_numbers = #tpu.dot_dimension_numbers<[1], [0], [0], [1], [0, 0, 1, 1], [], []>} : vector<8x8xbf16>, vector<8x8xbf16>, vector<8x8xf32> -> vector<8x8xf32>
    %89 = vector.extract_strided_slice %72 {offsets = [40, 0], sizes = [8, 8], strides = [1, 1]} : vector<64x8xbf16> to vector<8x8xbf16>
    %90 = vector.extract_strided_slice %26 {offsets = [8, 8], sizes = [8, 8], strides = [1, 1]} : vector<16x32xbf16> to vector<8x8xbf16>
    %cst_42 = arith.constant dense<0.000000e+00> : vector<8x8xf32>
    %91 = tpu.matmul %89, %90, %cst_42 {dimension_numbers = #tpu.dot_dimension_numbers<[1], [0], [0], [1], [0, 0, 1, 1], [], []>} : vector<8x8xbf16>, vector<8x8xbf16>, vector<8x8xf32> -> vector<8x8xf32>
    %92 = vector.extract_strided_slice %72 {offsets = [48, 0], sizes = [8, 8], strides = [1, 1]} : vector<64x8xbf16> to vector<8x8xbf16>
    %93 = vector.extract_strided_slice %26 {offsets = [8, 16], sizes = [8, 8], strides = [1, 1]} : vector<16x32xbf16> to vector<8x8xbf16>
    %cst_43 = arith.constant dense<0.000000e+00> : vector<8x8xf32>
    %94 = tpu.matmul %92, %93, %cst_43 {dimension_numbers = #tpu.dot_dimension_numbers<[1], [0], [0], [1], [0, 0, 1, 1], [], []>} : vector<8x8xbf16>, vector<8x8xbf16>, vector<8x8xf32> -> vector<8x8xf32>
    %95 = vector.extract_strided_slice %72 {offsets = [56, 0], sizes = [8, 8], strides = [1, 1]} : vector<64x8xbf16> to vector<8x8xbf16>
    %96 = vector.extract_strided_slice %26 {offsets = [8, 24], sizes = [8, 8], strides = [1, 1]} : vector<16x32xbf16> to vector<8x8xbf16>
    %cst_44 = arith.constant dense<0.000000e+00> : vector<8x8xf32>
    %97 = tpu.matmul %95, %96, %cst_44 {dimension_numbers = #tpu.dot_dimension_numbers<[1], [0], [0], [1], [0, 0, 1, 1], [], []>} : vector<8x8xbf16>, vector<8x8xbf16>, vector<8x8xf32> -> vector<8x8xf32>
    %98 = tpu.concatenate %88, %91, %94, %97 in 1 : vector<8x8xf32>, vector<8x8xf32>, vector<8x8xf32>, vector<8x8xf32> -> vector<8x32xf32>
    %99 = tpu.concatenate %85, %98 in 0 : vector<8x32xf32>, vector<8x32xf32> -> vector<16x32xf32>
    %100 = arith.truncf %99 : vector<16x32xf32> to vector<16x32xbf16>
    %c0_45 = arith.constant 0 : index
    %c0_46 = arith.constant 0 : index
    %101 = vector.load %arg11[%c0_45, %c0_46] : memref<32x32xbf16, #tpu.memory_space<vmem>>, vector<32x32xbf16>
    %cst_47 = arith.constant dense<0.000000e+00> : vector<16x32xf32>
    %102 = tpu.matmul %100, %101, %cst_47 {dimension_numbers = #tpu.dot_dimension_numbers<[1], [0], [0], [1], [0, 0, 1, 1], [], []>} : vector<16x32xbf16>, vector<32x32xbf16>, vector<16x32xf32> -> vector<16x32xf32>
    %c0_48 = arith.constant 0 : index
    %c0_49 = arith.constant 0 : index
    %103 = vector.load %arg12[%c0_48, %c0_49] : memref<1x32xf32, #tpu.memory_space<vmem>>, vector<1x32xf32>
    %104 = vector.broadcast %103 : vector<1x32xf32> to vector<16x32xf32>
    %105 = arith.addf %102, %104 : vector<16x32xf32>
    %106 = vector.shape_cast %105 : vector<16x32xf32> to vector<2x8x32xf32>
    %c0_50 = arith.constant 0 : index
    %c0_51 = arith.constant 0 : index
    %c0_52 = arith.constant 0 : index
    %107 = vector.load %arg13[%c0_50, %c0_51, %c0_52] : memref<2x8x32xf32, #tpu.memory_space<vmem>>, vector<2x8x32xf32>
    tpu.vector_store %arg13[%c0_50, %c0_51, %c0_52], %106 {strides = array<i32>} : memref<2x8x32xf32, #tpu.memory_space<vmem>>, vector<2x8x32xf32>,
    return
  }
  func.func @transform_0(%arg0: i32) -> (i32, i32, i32) {
    %c0_i32 = arith.constant 0 : i32
    %c0_i32_0 = arith.constant 0 : i32
    %c0_i32_1 = arith.constant 0 : i32
    return %arg0, %c0_i32, %c0_i32_0 : i32, i32, i32
  }
  func.func @transform_1(%arg0: i32) -> (i32, i32, i32) {
    %c0_i32 = arith.constant 0 : i32
    %c0_i32_0 = arith.constant 0 : i32
    %c0_i32_1 = arith.constant 0 : i32
    return %arg0, %c0_i32, %c0_i32_0 : i32, i32, i32
  }
  func.func @transform_2(%arg0: i32) -> (i32, i32, i32) {
    %c0_i32 = arith.constant 0 : i32
    %c0_i32_0 = arith.constant 0 : i32
    %c0_i32_1 = arith.constant 0 : i32
    return %arg0, %c0_i32, %c0_i32_0 : i32, i32, i32
  }
  func.func @transform_3(%arg0: i32) -> (i32, i32, i32) {
    %c0_i32 = arith.constant 0 : i32
    %c0_i32_0 = arith.constant 0 : i32
    %c0_i32_1 = arith.constant 0 : i32
    return %arg0, %c0_i32, %c0_i32_0 : i32, i32, i32
  }
  func.func @transform_4(%arg0: i32) -> (i32, i32) {
    %c0_i32 = arith.constant 0 : i32
    %c0_i32_0 = arith.constant 0 : i32
    %c0_i32_1 = arith.constant 0 : i32
    return %c0_i32, %c0_i32_0 : i32, i32
  }
  func.func @transform_5(%arg0: i32) -> (i32, i32) {
    %c0_i32 = arith.constant 0 : i32
    %c0_i32_0 = arith.constant 0 : i32
    %c0_i32_1 = arith.constant 0 : i32
    return %c0_i32, %c0_i32_0 : i32, i32
  }
  func.func @transform_6(%arg0: i32) -> (i32, i32) {
    %c0_i32 = arith.constant 0 : i32
    %c0_i32_0 = arith.constant 0 : i32
    %c0_i32_1 = arith.constant 0 : i32
    return %c0_i32, %c0_i32_0 : i32, i32
  }
  func.func @transform_7(%arg0: i32) -> (i32, i32) {
    %c0_i32 = arith.constant 0 : i32
    %c0_i32_0 = arith.constant 0 : i32
    %c0_i32_1 = arith.constant 0 : i32
    return %c0_i32, %c0_i32_0 : i32, i32
  }
  func.func @transform_8(%arg0: i32) -> (i32, i32) {
    %c0_i32 = arith.constant 0 : i32
    %c0_i32_0 = arith.constant 0 : i32
    %c0_i32_1 = arith.constant 0 : i32
    return %c0_i32, %c0_i32_0 : i32, i32
  }
  func.func @transform_9(%arg0: i32) -> (i32, i32) {
    %c0_i32 = arith.constant 0 : i32
    %c0_i32_0 = arith.constant 0 : i32
    %c0_i32_1 = arith.constant 0 : i32
    return %c0_i32, %c0_i32_0 : i32, i32
  }
  func.func @transform_10(%arg0: i32) -> (i32, i32) {
    %c0_i32 = arith.constant 0 : i32
    %c0_i32_0 = arith.constant 0 : i32
    %c0_i32_1 = arith.constant 0 : i32
    return %c0_i32, %c0_i32_0 : i32, i32
  }
  func.func @transform_11(%arg0: i32) -> (i32, i32) {
    %c0_i32 = arith.constant 0 : i32
    %c0_i32_0 = arith.constant 0 : i32
    %c0_i32_1 = arith.constant 0 : i32
    return %c0_i32, %c0_i32_0 : i32, i32
  }
  func.func @transform_12(%arg0: i32) -> (i32, i32, i32) {
    %c0_i32 = arith.constant 0 : i32
    %c0_i32_0 = arith.constant 0 : i32
    %c0_i32_1 = arith.constant 0 : i32
    return %arg0, %c0_i32, %c0_i32_0 : i32, i32, i32
  }
}

</mosaic_0001>

<llo_original>
// kernel: tpu_custom_call.1
$region0: #{tpu_custom_call.1}
  #allocation0 [shape = 'u32[]', space=smem, size = 0x4, offset = 0x4, fixed_abs, tag = 'smem constant byte address 0x4 - core index']
  #allocation1 [shape = 'u32[144,128]{1,0:T(1,128)}', space=vmem, size = 0x12000, scoped, tag = 'internal scratch']
  %s0 = inlined_call_operand.hbm [shape: f32[2,8,32], index: 0, kind: input, shape index: {}]
  %s1 = inlined_call_operand.hbm [shape: f32[2,8,32], index: 1, kind: input, shape index: {}]
  %s2 = inlined_call_operand.hbm [shape: f32[2,8,32], index: 2, kind: input, shape index: {}]
  %s3 = inlined_call_operand.hbm [shape: f32[2,8,8], index: 3, kind: input, shape index: {}]
  %s4 = inlined_call_operand.hbm [shape: bf16[32,32], index: 4, kind: input, shape index: {}]
  %s5 = inlined_call_operand.vmem [shape: f32[1,32], index: 5, kind: input, shape index: {}]
  %s6 = inlined_call_operand.vmem [shape: bf16[32,32], index: 6, kind: input, shape index: {}]
  %s7 = inlined_call_operand.vmem [shape: f32[1,32], index: 7, kind: input, shape index: {}]
  %s8 = inlined_call_operand.hbm [shape: bf16[32,32], index: 8, kind: input, shape index: {}]
  %s9 = inlined_call_operand.hbm [shape: f32[1,32], index: 9, kind: input, shape index: {}]
  %s10 = inlined_call_operand.vmem [shape: bf16[32,32], index: 10, kind: input, shape index: {}]
  %s11 = inlined_call_operand.vmem [shape: f32[1,32], index: 11, kind: input, shape index: {}]
  %s12 = inlined_call_operand.hbm [shape: f32[2,8,32], index: 12, kind: output, shape index: {}]
  %s13 = sld [smem:[#allocation0]]
  $region86: #{tpu_custom_call.1} parent=0
    _
  %s15 = ssub.s32 1, %s13
  %s16 = scalar_select 0, %s15, %s13
  $region1: #{tpu_custom_call.1} parent=0
    #allocation2 [shape = 'u8[8192]{0}', space=vmem, size = 0x2000, scoped, tag = 'input window, operand 0, single buffered']
    #allocation3 [shape = 's32[1]{0}', space=sflag, size = 0x4, scoped, tag = 'scoped memory for tpu_custom_call.1']
    #allocation4 [shape = 's32[1]{0}', space=sflag, size = 0x4, scoped, tag = 'scoped memory for tpu_custom_call.1']
    #allocation5 [shape = 'u8[8192]{0}', space=vmem, size = 0x2000, scoped, tag = 'input window, operand 1, single buffered']
    #allocation6 [shape = 's32[1]{0}', space=sflag, size = 0x4, scoped, tag = 'scoped memory for tpu_custom_call.1']
    #allocation7 [shape = 'u8[8192]{0}', space=vmem, size = 0x2000, scoped, tag = 'input window, operand 2, single buffered']
    #allocation8 [shape = 'u8[8192]{0}', space=vmem, size = 0x2000, scoped, tag = 'input window, operand 3, single buffered']
    #allocation9 [shape = 's32[1]{0}', space=sflag, size = 0x4, scoped, tag = 'scoped memory for tpu_custom_call.1']
    #allocation10 [shape = 'u8[8192]{0}', space=vmem, size = 0x2000, scoped, tag = 'input window, operand 4, single buffered']
    #allocation11 [shape = 'u8[8192]{0}', space=vmem, size = 0x2000, scoped, tag = 'input window, operand 8, single buffered']
    #allocation12 [shape = 's32[1]{0}', space=sflag, size = 0x4, scoped, tag = 'scoped memory for tpu_custom_call.1']
    #allocation13 [shape = 'u8[512]{0}', space=vmem, size = 0x400, scoped, tag = 'input window, operand 9, single buffered']
    #allocation14 [shape = 'u8[8192]{0}', space=vmem, size = 0x2000, scoped, tag = 'output window, operand 0, single buffered']
    %17 = vsyncpa [#allocation3], 0
    %18 = vsyncpa [#allocation6], 0
    %19 = vsyncpa [#allocation9], 0
    %20 = vsyncpa [#allocation12], 0
    %21 = vsyncpa [#allocation4], 0
    // Predicated region
    $region2: #{tpu_custom_call.1} parent=1 // pred_check
      _
    $region3: #{tpu_custom_call.1} parent=1 // pred_check_branch
      %23 = sbr.rel (0) target = $region5
    $region4: #{tpu_custom_call.1} parent=1 // pred_region
      %s25 = ssub.s32 256, 256
      %26 = vsyncadd [#allocation3], %s25
      %s27 = sshll.u32 [#allocation2], 4
      %s28 = int_to_ptr.vmem [resolvable:$true] %s27
      %33 = dma.hbm_to_vmem [thread:$0]  %s0, 256, %s28, [#allocation3], 128, 128, 8
    $region5: #{tpu_custom_call.1} parent=1 // pred_fallthru
      _
    // Predicated region
    $region6: #{tpu_custom_call.1} parent=1 // pred_check
      _
    $region7: #{tpu_custom_call.1} parent=1 // pred_check_branch
      %35 = sbr.rel (0) target = $region9
    $region8: #{tpu_custom_call.1} parent=1 // pred_region
      %s37 = ssub.s32 256, 256
      %38 = vsyncadd [#allocation6], %s37
      %s39 = sshll.u32 [#allocation5], 4
      %s40 = int_to_ptr.vmem [resolvable:$true] %s39
      %45 = dma.hbm_to_vmem [thread:$0]  %s1, 256, %s40, [#allocation6], 128, 128, 8
    $region9: #{tpu_custom_call.1} parent=1 // pred_fallthru
      _
    // Predicated region
    $region10: #{tpu_custom_call.1} parent=1 // pred_check
      _
    $region11: #{tpu_custom_call.1} parent=1 // pred_check_branch
      %47 = sbr.rel (0) target = $region13
    $region12: #{tpu_custom_call.1} parent=1 // pred_region
      %s49 = ssub.s32 256, 256
      %50 = vsyncadd [#allocation6], %s49
      %s51 = sshll.u32 [#allocation7], 4
      %s52 = int_to_ptr.vmem [resolvable:$true] %s51
      %57 = dma.hbm_to_vmem [thread:$0]  %s2, 256, %s52, [#allocation6], 128, 128, 8
    $region13: #{tpu_custom_call.1} parent=1 // pred_fallthru
      _
    // Predicated region
    $region14: #{tpu_custom_call.1} parent=1 // pred_check
      _
    $region15: #{tpu_custom_call.1} parent=1 // pred_check_branch
      %59 = sbr.rel (0) target = $region17
    $region16: #{tpu_custom_call.1} parent=1 // pred_region
      %s61 = ssub.s32 256, 256
      %62 = vsyncadd [#allocation9], %s61
      %s63 = sshll.u32 [#allocation8], 4
      %s64 = int_to_ptr.vmem [resolvable:$true] %s63
      %69 = dma.hbm_to_vmem [thread:$0]  %s3, 256, %s64, [#allocation9], 128, 128, 8
    $region17: #{tpu_custom_call.1} parent=1 // pred_fallthru
      _
    // Predicated region
    $region18: #{tpu_custom_call.1} parent=1 // pred_check
      _
    $region19: #{tpu_custom_call.1} parent=1 // pred_check_branch
      %71 = sbr.rel (0) target = $region21
    $region20: #{tpu_custom_call.1} parent=1 // pred_region
      %s73 = ssub.s32 256, 256
      %74 = vsyncadd [#allocation9], %s73
      %s75 = sshll.u32 [#allocation10], 4
      %s76 = int_to_ptr.vmem [resolvable:$true] %s75
      %81 = dma.hbm_to_vmem [thread:$0]  %s4, 256, %s76, [#allocation9], 64, 64, 4
    $region21: #{tpu_custom_call.1} parent=1 // pred_fallthru
      _
    // Predicated region
    $region22: #{tpu_custom_call.1} parent=1 // pred_check
      _
    $region23: #{tpu_custom_call.1} parent=1 // pred_check_branch
      %83 = sbr.rel (0) target = $region25
    $region24: #{tpu_custom_call.1} parent=1 // pred_region
      _
    $region25: #{tpu_custom_call.1} parent=1 // pred_fallthru
      _
    // Predicated region
    $region26: #{tpu_custom_call.1} parent=1 // pred_check
      _
    $region27: #{tpu_custom_call.1} parent=1 // pred_check_branch
      %85 = sbr.rel (0) target = $region29
    $region28: #{tpu_custom_call.1} parent=1 // pred_region
      _
    $region29: #{tpu_custom_call.1} parent=1 // pred_fallthru
      _
    // Predicated region
    $region30: #{tpu_custom_call.1} parent=1 // pred_check
      _
    $region31: #{tpu_custom_call.1} parent=1 // pred_check_branch
      %87 = sbr.rel (0) target = $region33
    $region32: #{tpu_custom_call.1} parent=1 // pred_region
      _
    $region33: #{tpu_custom_call.1} parent=1 // pred_fallthru
      _
    // Predicated region
    $region34: #{tpu_custom_call.1} parent=1 // pred_check
      _
    $region35: #{tpu_custom_call.1} parent=1 // pred_check_branch
      %89 = sbr.rel (0) target = $region37
    $region36: #{tpu_custom_call.1} parent=1 // pred_region
      %s91 = ssub.s32 256, 256
      %92 = vsyncadd [#allocation12], %s91
      %s93 = sshll.u32 [#allocation11], 4
      %s94 = int_to_ptr.vmem [resolvable:$true] %s93
      %99 = dma.hbm_to_vmem [thread:$0]  %s8, 256, %s94, [#allocation12], 64, 64, 4
    $region37: #{tpu_custom_call.1} parent=1 // pred_fallthru
      _
    // Predicated region
    $region38: #{tpu_custom_call.1} parent=1 // pred_check
      _
    $region39: #{tpu_custom_call.1} parent=1 // pred_check_branch
      %101 = sbr.rel (0) target = $region41
    $region40: #{tpu_custom_call.1} parent=1 // pred_region
      %s103 = ssub.s32 16, 16
      %104 = vsyncadd [#allocation12], %s103
      %s106 = sshll.u32 [#allocation13], 4
      %s107 = int_to_ptr.vmem [resolvable:$true] %s106
      %109 = dma.hbm_to_vmem [thread:$0]  %s9, 16, %s107, [#allocation12]
    $region41: #{tpu_custom_call.1} parent=1 // pred_fallthru
      _
    // Predicated region
    $region42: #{tpu_custom_call.1} parent=1 // pred_check
      _
    $region43: #{tpu_custom_call.1} parent=1 // pred_check_branch
      %111 = sbr.rel (0) target = $region45
    $region44: #{tpu_custom_call.1} parent=1 // pred_region
      _
    $region45: #{tpu_custom_call.1} parent=1 // pred_fallthru
      _
    // Predicated region
    $region46: #{tpu_custom_call.1} parent=1 // pred_check
      _
    $region47: #{tpu_custom_call.1} parent=1 // pred_check_branch
      %113 = sbr.rel (0) target = $region49
    $region48: #{tpu_custom_call.1} parent=1 // pred_region
      _
    $region49: #{tpu_custom_call.1} parent=1 // pred_fallthru
      _
    // Predicated region
    $region50: #{tpu_custom_call.1} parent=1 // pred_check
      _
    $region51: #{tpu_custom_call.1} parent=1 // pred_check_branch
      %115 = sbr.rel (0) target = $region53
    $region52: #{tpu_custom_call.1} parent=1 // pred_region
      %116 = dma.done [#allocation3], 256
    $region53: #{tpu_custom_call.1} parent=1 // pred_fallthru
      _
    // Predicated region
    $region54: #{tpu_custom_call.1} parent=1 // pred_check
      _
    $region55: #{tpu_custom_call.1} parent=1 // pred_check_branch
      %118 = sbr.rel (0) target = $region57
    $region56: #{tpu_custom_call.1} parent=1 // pred_region
      %119 = dma.done [#allocation6], 256
    $region57: #{tpu_custom_call.1} parent=1 // pred_fallthru
      _
    // Predicated region
    $region58: #{tpu_custom_call.1} parent=1 // pred_check
      _
    $region59: #{tpu_custom_call.1} parent=1 // pred_check_branch
      %121 = sbr.rel (0) target = $region61
    $region60: #{tpu_custom_call.1} parent=1 // pred_region
      %122 = dma.done [#allocation6], 256
    $region61: #{tpu_custom_call.1} parent=1 // pred_fallthru
      _
    // Predicated region
    $region62: #{tpu_custom_call.1} parent=1 // pred_check
      _
    $region63: #{tpu_custom_call.1} parent=1 // pred_check_branch
      %124 = sbr.rel (0) target = $region65
    $region64: #{tpu_custom_call.1} parent=1 // pred_region
      %125 = dma.done [#allocation9], 256
    $region65: #{tpu_custom_call.1} parent=1 // pred_fallthru
      _
    // Predicated region
    $region66: #{tpu_custom_call.1} parent=1 // pred_check
      _
    $region67: #{tpu_custom_call.1} parent=1 // pred_check_branch
      %127 = sbr.rel (0) target = $region69
    $region68: #{tpu_custom_call.1} parent=1 // pred_region
      %128 = dma.done [#allocation9], 256
    $region69: #{tpu_custom_call.1} parent=1 // pred_fallthru
      _
    // Predicated region
    $region70: #{tpu_custom_call.1} parent=1 // pred_check
      _
    $region71: #{tpu_custom_call.1} parent=1 // pred_check_branch
      %130 = sbr.rel (0) target = $region73
    $region72: #{tpu_custom_call.1} parent=1 // pred_region
      %131 = dma.done [#allocation12], 256
    $region73: #{tpu_custom_call.1} parent=1 // pred_fallthru
      _
    // Predicated region
    $region74: #{tpu_custom_call.1} parent=1 // pred_check
      _
    $region75: #{tpu_custom_call.1} parent=1 // pred_check_branch
      %133 = sbr.rel (0) target = $region77
    $region76: #{tpu_custom_call.1} parent=1 // pred_region
      %134 = dma.done [#allocation12], 16
    $region77: #{tpu_custom_call.1} parent=1 // pred_fallthru
      _
    %v136 = vld [vmem:[#allocation2] sm:$0xff]
    %v137 = vld [vmem:[#allocation2 + $0x8] sm:$0xff]
    %v138 = vpack.c.bf16 %v137, %v136
    %v139 = vld [vmem:[#allocation5] sm:$0xff]
    %v140 = vld [vmem:[#allocation5 + $0x8] sm:$0xff]
    %v141 = vpack.c.bf16 %v140, %v139
    %v142 = vld [vmem:[#allocation7] sm:$0xff]
    %v143 = vld [vmem:[#allocation7 + $0x8] sm:$0xff]
    %v144 = vpack.c.bf16 %v143, %v142
    %v145 = vld [vmem:[#allocation10] sm:$0xf]
    %v146 = vld [vmem:[#allocation10 + $0x4] sm:$0xf]
    %v147 = vld [vmem:[#allocation10 + $0x8] sm:$0xf]
    %v148 = vld [vmem:[#allocation10 + $0xc] sm:$0xf]
    %v149 = vld [vmem:[%s5] sm:$0x1]
    %v151 = vlaneseq
    %v152 = vshrl.u32 %v151, 7
    %v153 = vsub.s32 0, %v152
    %v154 = vrot.slane %v149, %v153
    %v160 = vunpack.c.l.b16 %v145
    %v161 = vunpack.c.l.b16 %v146
    %v162 = vunpack.c.l.b16 %v147
    %v163 = vunpack.c.l.b16 %v148
    %v164 = vpack.c.b16 %v161, %v160
    %v165 = vpack.c.b16 %v163, %v162
    %vm168 = vcmask 261120
    %v170 = vsel %vm168, %v138, 0
    %172 = vmatprep.subr.bf16.mxu0 0
    %173 = vmatpush1.bf16.msra.mxu0 %v164
    %174 = vmatprep.subr.bf16.mxu0 0
    %175 = vmatpush1.bf16.msra.mxu0 %v165
    %176 = vmatprep.subr.bf16.mxu0 0
    %177 = vmatpush1.bf16.msra.mxu0 0
    %178 = vmatprep.subr.bf16.mxu0 0
    %179 = vmatpush1.bf16.msra.mxu0 0
    %180 = vmatprep.subr.bf16.mxu0 0
    %181 = vmatpush1.bf16.msra.mxu0 0
    %182 = vmatprep.subr.bf16.mxu0 0
    %183 = vmatpush1.bf16.msra.mxu0 0
    %184 = vmatprep.subr.bf16.mxu0 0
    %185 = vmatpush1.bf16.msra.mxu0 0
    %186 = vmatprep.subr.bf16.mxu0 0
    %187 = vmatpush1.bf16.msra.mxu0 0
    %188 = vmatprep.subr.bf16.mxu0 0
    %189 = vmatpush1.bf16.msra.mxu0 0
    %190 = vmatprep.subr.bf16.mxu0 0
    %191 = vmatpush1.bf16.msra.mxu0 0
    %192 = vmatprep.subr.bf16.mxu0 0
    %193 = vmatpush1.bf16.msra.mxu0 0
    %194 = vmatprep.subr.bf16.mxu0 0
    %195 = vmatpush1.bf16.msra.mxu0 0
    %196 = vmatprep.subr.bf16.mxu0 0
    %197 = vmatpush1.bf16.msra.mxu0 0
    %198 = vmatprep.subr.bf16.mxu0 0
    %199 = vmatpush1.bf16.msra.mxu0 0
    %200 = vmatprep.subr.bf16.mxu0 0
    %201 = vmatpush1.bf16.msra.mxu0 0
    %202 = vmatprep.subr.bf16.mxu0 0
    %203 = vmatpush1.bf16.msra.mxu0 0
    %204 = vmatprep.mubr.bf16.mxu0 0
    %205 = vmatmul.mubr.bf16.gmra.mrb[0].mxu0 %v170
    %v206 = vpop.f32.mrb[0].mxu0
    %v207 = vadd.f32 %v154, %v206
    %v208 = vpop.f32.mrb[0].mxu0
    %v209 = vpop.f32.mrb[0].mxu0
    %v210 = vadd.f32 %v154, %v209
    %v211 = vpop.f32.mrb[0].mxu0
    %212 = vdwg.mxu0
    %v213 = vpack.c.bf16 %v210, %v207
    %v214 = vld [vmem:[%s6] sm:$0xf]
    %v215 = vld [vmem:[%s6 + $0x4] sm:$0xf]
    %v216 = vld [vmem:[%s6 + $0x8] sm:$0xf]
    %v217 = vld [vmem:[%s6 + $0xc] sm:$0xf]
    %v218 = vld [vmem:[%s7] sm:$0x1]
    %v220 = vlaneseq
    %v221 = vshrl.u32 %v220, 7
    %v222 = vsub.s32 0, %v221
    %v223 = vrot.slane %v218, %v222
    %v229 = vunpack.c.l.b16 %v214
    %v230 = vunpack.c.l.b16 %v215
    %v231 = vunpack.c.l.b16 %v216
    %v232 = vunpack.c.l.b16 %v217
    %v233 = vpack.c.b16 %v230, %v229
    %v234 = vpack.c.b16 %v232, %v231
    %v238 = vsel %vm168, %v141, 0
    %240 = vmatprep.subr.bf16.mxu0 0
    %241 = vmatpush1.bf16.msra.mxu0 %v233
    %242 = vmatprep.subr.bf16.mxu0 0
    %243 = vmatpush1.bf16.msra.mxu0 %v234
    %244 = vmatprep.subr.bf16.mxu0 0
    %245 = vmatpush1.bf16.msra.mxu0 0
    %246 = vmatprep.subr.bf16.mxu0 0
    %247 = vmatpush1.bf16.msra.mxu0 0
    %248 = vmatprep.subr.bf16.mxu0 0
    %249 = vmatpush1.bf16.msra.mxu0 0
    %250 = vmatprep.subr.bf16.mxu0 0
    %251 = vmatpush1.bf16.msra.mxu0 0
    %252 = vmatprep.subr.bf16.mxu0 0
    %253 = vmatpush1.bf16.msra.mxu0 0
    %254 = vmatprep.subr.bf16.mxu0 0
    %255 = vmatpush1.bf16.msra.mxu0 0
    %256 = vmatprep.subr.bf16.mxu0 0
    %257 = vmatpush1.bf16.msra.mxu0 0
    %258 = vmatprep.subr.bf16.mxu0 0
    %259 = vmatpush1.bf16.msra.mxu0 0
    %260 = vmatprep.subr.bf16.mxu0 0
    %261 = vmatpush1.bf16.msra.mxu0 0
    %262 = vmatprep.subr.bf16.mxu0 0
    %263 = vmatpush1.bf16.msra.mxu0 0
    %264 = vmatprep.subr.bf16.mxu0 0
    %265 = vmatpush1.bf16.msra.mxu0 0
    %266 = vmatprep.subr.bf16.mxu0 0
    %267 = vmatpush1.bf16.msra.mxu0 0
    %268 = vmatprep.subr.bf16.mxu0 0
    %269 = vmatpush1.bf16.msra.mxu0 0
    %270 = vmatprep.subr.bf16.mxu0 0
    %271 = vmatpush1.bf16.msra.mxu0 0
    %272 = vmatprep.mubr.bf16.mxu0 0
    %273 = vmatmul.mubr.bf16.gmra.mrb[0].mxu0 %v238
    %v274 = vpop.f32.mrb[0].mxu0
    %v275 = vadd.f32 %v223, %v274
    %v276 = vpop.f32.mrb[0].mxu0
    %v277 = vpop.f32.mrb[0].mxu0
    %v278 = vadd.f32 %v223, %v277
    %v279 = vpop.f32.mrb[0].mxu0
    %280 = vdwg.mxu0
    %v281 = vpack.c.bf16 %v278, %v275
    %v282 = vld [vmem:[#allocation11] sm:$0xf]
    %v283 = vld [vmem:[#allocation11 + $0x4] sm:$0xf]
    %v284 = vld [vmem:[#allocation11 + $0x8] sm:$0xf]
    %v285 = vld [vmem:[#allocation11 + $0xc] sm:$0xf]
    %v286 = vld [vmem:[#allocation13] sm:$0x1]
    %v288 = vlaneseq
    %v289 = vshrl.u32 %v288, 7
    %v290 = vsub.s32 0, %v289
    %v291 = vrot.slane %v286, %v290
    %v297 = vunpack.c.l.b16 %v282
    %v298 = vunpack.c.l.b16 %v283
    %v299 = vunpack.c.l.b16 %v284
    %v300 = vunpack.c.l.b16 %v285
    %v301 = vpack.c.b16 %v298, %v297
    %v302 = vpack.c.b16 %v300, %v299
    %v306 = vsel %vm168, %v144, 0
    %308 = vmatprep.subr.bf16.mxu0 0
    %309 = vmatpush1.bf16.msra.mxu0 %v301
    %310 = vmatprep.subr.bf16.mxu0 0
    %311 = vmatpush1.bf16.msra.mxu0 %v302
    %312 = vmatprep.subr.bf16.mxu0 0
    %313 = vmatpush1.bf16.msra.mxu0 0
    %314 = vmatprep.subr.bf16.mxu0 0
    %315 = vmatpush1.bf16.msra.mxu0 0
    %316 = vmatprep.subr.bf16.mxu0 0
    %317 = vmatpush1.bf16.msra.mxu0 0
    %318 = vmatprep.subr.bf16.mxu0 0
    %319 = vmatpush1.bf16.msra.mxu0 0
    %320 = vmatprep.subr.bf16.mxu0 0
    %321 = vmatpush1.bf16.msra.mxu0 0
    %322 = vmatprep.subr.bf16.mxu0 0
    %323 = vmatpush1.bf16.msra.mxu0 0
    %324 = vmatprep.subr.bf16.mxu0 0
    %325 = vmatpush1.bf16.msra.mxu0 0
    %326 = vmatprep.subr.bf16.mxu0 0
    %327 = vmatpush1.bf16.msra.mxu0 0
    %328 = vmatprep.subr.bf16.mxu0 0
    %329 = vmatpush1.bf16.msra.mxu0 0
    %330 = vmatprep.subr.bf16.mxu0 0
    %331 = vmatpush1.bf16.msra.mxu0 0
    %332 = vmatprep.subr.bf16.mxu0 0
    %333 = vmatpush1.bf16.msra.mxu0 0
    %334 = vmatprep.subr.bf16.mxu0 0
    %335 = vmatpush1.bf16.msra.mxu0 0
    %336 = vmatprep.subr.bf16.mxu0 0
    %337 = vmatpush1.bf16.msra.mxu0 0
    %338 = vmatprep.subr.bf16.mxu0 0
    %339 = vmatpush1.bf16.msra.mxu0 0
    %340 = vmatprep.mubr.bf16.mxu0 0
    %341 = vmatmul.mubr.bf16.gmra.mrb[0].mxu0 %v306
    %v342 = vpop.f32.mrb[0].mxu0
    %v343 = vadd.f32 %v291, %v342
    %v344 = vpop.f32.mrb[0].mxu0
    %v345 = vpop.f32.mrb[0].mxu0
    %v346 = vadd.f32 %v291, %v345
    %v347 = vpop.f32.mrb[0].mxu0
    %348 = vdwg.mxu0
    %v349 = vpack.c.bf16 %v346, %v343
    %v350 = vld [vmem:[#allocation8] sm:$0xff]
    %v351 = vld [vmem:[#allocation8 + $0x8] sm:$0xff]
    %vm352 = vcmask 64512
    %v354 = vsel %vm352, %v213, 0
    %v357 = vsel %vm352, %v281, 0
    %359 = vmatprep.subr.bf16.mxu0 0
    %360 = vmatpush1.bf16.xpose.msra.mxu0 %v357
    %361 = vmatprep.subr.bf16.mxu0 0
    %362 = vmatpush1.bf16.xpose.msra.mxu0 0
    %363 = vmatprep.subr.bf16.mxu0 0
    %364 = vmatpush1.bf16.xpose.msra.mxu0 0
    %365 = vmatprep.subr.bf16.mxu0 0
    %366 = vmatpush1.bf16.xpose.msra.mxu0 0
    %367 = vmatprep.subr.bf16.mxu0 0
    %368 = vmatpush1.bf16.xpose.msra.mxu0 0
    %369 = vmatprep.subr.bf16.mxu0 0
    %370 = vmatpush1.bf16.xpose.msra.mxu0 0
    %371 = vmatprep.subr.bf16.mxu0 0
    %372 = vmatpush1.bf16.xpose.msra.mxu0 0
    %373 = vmatprep.subr.bf16.mxu0 0
    %374 = vmatpush1.bf16.xpose.msra.mxu0 0
    %375 = vmatprep.subr.bf16.mxu0 0
    %376 = vmatpush1.bf16.xpose.msra.mxu0 0
    %377 = vmatprep.subr.bf16.mxu0 0
    %378 = vmatpush1.bf16.xpose.msra.mxu0 0
    %379 = vmatprep.subr.bf16.mxu0 0
    %380 = vmatpush1.bf16.xpose.msra.mxu0 0
    %381 = vmatprep.subr.bf16.mxu0 0
    %382 = vmatpush1.bf16.xpose.msra.mxu0 0
    %383 = vmatprep.subr.bf16.mxu0 0
    %384 = vmatpush1.bf16.xpose.msra.mxu0 0
    %385 = vmatprep.subr.bf16.mxu0 0
    %386 = vmatpush1.bf16.xpose.msra.mxu0 0
    %387 = vmatprep.subr.bf16.mxu0 0
    %388 = vmatpush1.bf16.xpose.msra.mxu0 0
    %389 = vmatprep.subr.bf16.mxu0 0
    %390 = vmatpush1.bf16.xpose.msra.mxu0 0
    %391 = vmatprep.mubr.bf16.mxu0 0
    %392 = vmatmul.mubr.bf16.gmra.mrb[0].mxu0 %v354
    %v393 = vpop.f32.mrb[0].mxu0
    %v394 = vadd.f32 0.0, %v393
    %v395 = vpop.f32.mrb[0].mxu0
    %v396 = vpop.f32.mrb[0].mxu0
    %v397 = vpop.f32.mrb[0].mxu0
    %398 = vdwg.mxu0
    %400 = vrot.lane.b32.xlu0 %v213, 120
    %v401 = vpop.permute.xlu0 %400
    %403 = vrot.lane.b32.xlu0 %v281, 120
    %v404 = vpop.permute.xlu0 %403
    %v406 = vsel %vm352, %v401, 0
    %v409 = vsel %vm352, %v404, 0
    %411 = vmatprep.subr.bf16.mxu0 0
    %412 = vmatpush1.bf16.xpose.msra.mxu0 %v409
    %413 = vmatprep.subr.bf16.mxu0 0
    %414 = vmatpush1.bf16.xpose.msra.mxu0 0
    %415 = vmatprep.subr.bf16.mxu0 0
    %416 = vmatpush1.bf16.xpose.msra.mxu0 0
    %417 = vmatprep.subr.bf16.mxu0 0
    %418 = vmatpush1.bf16.xpose.msra.mxu0 0
    %419 = vmatprep.subr.bf16.mxu0 0
    %420 = vmatpush1.bf16.xpose.msra.mxu0 0
    %421 = vmatprep.subr.bf16.mxu0 0
    %422 = vmatpush1.bf16.xpose.msra.mxu0 0
    %423 = vmatprep.subr.bf16.mxu0 0
    %424 = vmatpush1.bf16.xpose.msra.mxu0 0
    %425 = vmatprep.subr.bf16.mxu0 0
    %426 = vmatpush1.bf16.xpose.msra.mxu0 0
    %427 = vmatprep.subr.bf16.mxu0 0
    %428 = vmatpush1.bf16.xpose.msra.mxu0 0
    %429 = vmatprep.subr.bf16.mxu0 0
    %430 = vmatpush1.bf16.xpose.msra.mxu0 0
    %431 = vmatprep.subr.bf16.mxu0 0
    %432 = vmatpush1.bf16.xpose.msra.mxu0 0
    %433 = vmatprep.subr.bf16.mxu0 0
    %434 = vmatpush1.bf16.xpose.msra.mxu0 0
    %435 = vmatprep.subr.bf16.mxu0 0
    %436 = vmatpush1.bf16.xpose.msra.mxu0 0
    %437 = vmatprep.subr.bf16.mxu0 0
    %438 = vmatpush1.bf16.xpose.msra.mxu0 0
    %439 = vmatprep.subr.bf16.mxu0 0
    %440 = vmatpush1.bf16.xpose.msra.mxu0 0
    %441 = vmatprep.subr.bf16.mxu0 0
    %442 = vmatpush1.bf16.xpose.msra.mxu0 0
    %443 = vmatprep.mubr.bf16.mxu0 0
    %444 = vmatmul.mubr.bf16.gmra.mrb[0].mxu0 %v406
    %v445 = vpop.f32.mrb[0].mxu0
    %v446 = vadd.f32 0.0, %v445
    %v447 = vpop.f32.mrb[0].mxu0
    %v448 = vpop.f32.mrb[0].mxu0
    %v449 = vpop.f32.mrb[0].mxu0
    %450 = vdwg.mxu0
    %451 = vrot.lane.b32.xlu0 %v213, 112
    %v452 = vpop.permute.xlu0 %451
    %453 = vrot.lane.b32.xlu0 %v281, 112
    %v454 = vpop.permute.xlu0 %453
    %v456 = vsel %vm352, %v452, 0
    %v459 = vsel %vm352, %v454, 0
    %461 = vmatprep.subr.bf16.mxu0 0
    %462 = vmatpush1.bf16.xpose.msra.mxu0 %v459
    %463 = vmatprep.subr.bf16.mxu0 0
    %464 = vmatpush1.bf16.xpose.msra.mxu0 0
    %465 = vmatprep.subr.bf16.mxu0 0
    %466 = vmatpush1.bf16.xpose.msra.mxu0 0
    %467 = vmatprep.subr.bf16.mxu0 0
    %468 = vmatpush1.bf16.xpose.msra.mxu0 0
    %469 = vmatprep.subr.bf16.mxu0 0
    %470 = vmatpush1.bf16.xpose.msra.mxu0 0
    %471 = vmatprep.subr.bf16.mxu0 0
    %472 = vmatpush1.bf16.xpose.msra.mxu0 0
    %473 = vmatprep.subr.bf16.mxu0 0
    %474 = vmatpush1.bf16.xpose.msra.mxu0 0
    %475 = vmatprep.subr.bf16.mxu0 0
    %476 = vmatpush1.bf16.xpose.msra.mxu0 0
    %477 = vmatprep.subr.bf16.mxu0 0
    %478 = vmatpush1.bf16.xpose.msra.mxu0 0
    %479 = vmatprep.subr.bf16.mxu0 0
    %480 = vmatpush1.bf16.xpose.msra.mxu0 0
    %481 = vmatprep.subr.bf16.mxu0 0
    %482 = vmatpush1.bf16.xpose.msra.mxu0 0
    %483 = vmatprep.subr.bf16.mxu0 0
    %484 = vmatpush1.bf16.xpose.msra.mxu0 0
    %485 = vmatprep.subr.bf16.mxu0 0
    %486 = vmatpush1.bf16.xpose.msra.mxu0 0
    %487 = vmatprep.subr.bf16.mxu0 0
    %488 = vmatpush1.bf16.xpose.msra.mxu0 0
    %489 = vmatprep.subr.bf16.mxu0 0
    %490 = vmatpush1.bf16.xpose.msra.mxu0 0
    %491 = vmatprep.subr.bf16.mxu0 0
    %492 = vmatpush1.bf16.xpose.msra.mxu0 0
    %493 = vmatprep.mubr.bf16.mxu0 0
    %494 = vmatmul.mubr.bf16.gmra.mrb[0].mxu0 %v456
    %v495 = vpop.f32.mrb[0].mxu0
    %v496 = vadd.f32 0.0, %v495
    %v497 = vpop.f32.mrb[0].mxu0
    %v498 = vpop.f32.mrb[0].mxu0
    %v499 = vpop.f32.mrb[0].mxu0
    %500 = vdwg.mxu0
    %501 = vrot.lane.b32.xlu0 %v213, 104
    %v502 = vpop.permute.xlu0 %501
    %503 = vrot.lane.b32.xlu0 %v281, 104
    %v504 = vpop.permute.xlu0 %503
    %v506 = vsel %vm352, %v502, 0
    %v509 = vsel %vm352, %v504, 0
    %511 = vmatprep.subr.bf16.mxu0 0
    %512 = vmatpush1.bf16.xpose.msra.mxu0 %v509
    %513 = vmatprep.subr.bf16.mxu0 0
    %514 = vmatpush1.bf16.xpose.msra.mxu0 0
    %515 = vmatprep.subr.bf16.mxu0 0
    %516 = vmatpush1.bf16.xpose.msra.mxu0 0
    %517 = vmatprep.subr.bf16.mxu0 0
    %518 = vmatpush1.bf16.xpose.msra.mxu0 0
    %519 = vmatprep.subr.bf16.mxu0 0
    %520 = vmatpush1.bf16.xpose.msra.mxu0 0
    %521 = vmatprep.subr.bf16.mxu0 0
    %522 = vmatpush1.bf16.xpose.msra.mxu0 0
    %523 = vmatprep.subr.bf16.mxu0 0
    %524 = vmatpush1.bf16.xpose.msra.mxu0 0
    %525 = vmatprep.subr.bf16.mxu0 0
    %526 = vmatpush1.bf16.xpose.msra.mxu0 0
    %527 = vmatprep.subr.bf16.mxu0 0
    %528 = vmatpush1.bf16.xpose.msra.mxu0 0
    %529 = vmatprep.subr.bf16.mxu0 0
    %530 = vmatpush1.bf16.xpose.msra.mxu0 0
    %531 = vmatprep.subr.bf16.mxu0 0
    %532 = vmatpush1.bf16.xpose.msra.mxu0 0
    %533 = vmatprep.subr.bf16.mxu0 0
    %534 = vmatpush1.bf16.xpose.msra.mxu0 0
    %535 = vmatprep.subr.bf16.mxu0 0
    %536 = vmatpush1.bf16.xpose.msra.mxu0 0
    %537 = vmatprep.subr.bf16.mxu0 0
    %538 = vmatpush1.bf16.xpose.msra.mxu0 0
    %539 = vmatprep.subr.bf16.mxu0 0
    %540 = vmatpush1.bf16.xpose.msra.mxu0 0
    %541 = vmatprep.subr.bf16.mxu0 0
    %542 = vmatpush1.bf16.xpose.msra.mxu0 0
    %543 = vmatprep.mubr.bf16.mxu0 0
    %544 = vmatmul.mubr.bf16.gmra.mrb[0].mxu0 %v506
    %v545 = vpop.f32.mrb[0].mxu0
    %v546 = vadd.f32 0.0, %v545
    %v547 = vpop.f32.mrb[0].mxu0
    %v548 = vpop.f32.mrb[0].mxu0
    %v549 = vpop.f32.mrb[0].mxu0
    %550 = vdwg.mxu0
    %v551 = vrot.slane %v213, 4
    %v552 = vrot.slane %v281, 4
    %v554 = vsel %vm352, %v551, 0
    %v557 = vsel %vm352, %v552, 0
    %559 = vmatprep.subr.bf16.mxu0 0
    %560 = vmatpush1.bf16.xpose.msra.mxu0 %v557
    %561 = vmatprep.subr.bf16.mxu0 0
    %562 = vmatpush1.bf16.xpose.msra.mxu0 0
    %563 = vmatprep.subr.bf16.mxu0 0
    %564 = vmatpush1.bf16.xpose.msra.mxu0 0
    %565 = vmatprep.subr.bf16.mxu0 0
    %566 = vmatpush1.bf16.xpose.msra.mxu0 0
    %567 = vmatprep.subr.bf16.mxu0 0
    %568 = vmatpush1.bf16.xpose.msra.mxu0 0
    %569 = vmatprep.subr.bf16.mxu0 0
    %570 = vmatpush1.bf16.xpose.msra.mxu0 0
    %571 = vmatprep.subr.bf16.mxu0 0
    %572 = vmatpush1.bf16.xpose.msra.mxu0 0
    %573 = vmatprep.subr.bf16.mxu0 0
    %574 = vmatpush1.bf16.xpose.msra.mxu0 0
    %575 = vmatprep.subr.bf16.mxu0 0
    %576 = vmatpush1.bf16.xpose.msra.mxu0 0
    %577 = vmatprep.subr.bf16.mxu0 0
    %578 = vmatpush1.bf16.xpose.msra.mxu0 0
    %579 = vmatprep.subr.bf16.mxu0 0
    %580 = vmatpush1.bf16.xpose.msra.mxu0 0
    %581 = vmatprep.subr.bf16.mxu0 0
    %582 = vmatpush1.bf16.xpose.msra.mxu0 0
    %583 = vmatprep.subr.bf16.mxu0 0
    %584 = vmatpush1.bf16.xpose.msra.mxu0 0
    %585 = vmatprep.subr.bf16.mxu0 0
    %586 = vmatpush1.bf16.xpose.msra.mxu0 0
    %587 = vmatprep.subr.bf16.mxu0 0
    %588 = vmatpush1.bf16.xpose.msra.mxu0 0
    %589 = vmatprep.subr.bf16.mxu0 0
    %590 = vmatpush1.bf16.xpose.msra.mxu0 0
    %591 = vmatprep.mubr.bf16.mxu0 0
    %592 = vmatmul.mubr.bf16.gmra.mrb[0].mxu0 %v554
    %v593 = vpop.f32.mrb[0].mxu0
    %v594 = vadd.f32 0.0, %v593
    %v595 = vpop.f32.mrb[0].mxu0
    %v596 = vpop.f32.mrb[0].mxu0
    %v597 = vpop.f32.mrb[0].mxu0
    %598 = vdwg.mxu0
    %599 = vrot.lane.b32.xlu0 %v551, 120
    %v600 = vpop.permute.xlu0 %599
    %601 = vrot.lane.b32.xlu0 %v552, 120
    %v602 = vpop.permute.xlu0 %601
    %v604 = vsel %vm352, %v600, 0
    %v607 = vsel %vm352, %v602, 0
    %609 = vmatprep.subr.bf16.mxu0 0
    %610 = vmatpush1.bf16.xpose.msra.mxu0 %v607
    %611 = vmatprep.subr.bf16.mxu0 0
    %612 = vmatpush1.bf16.xpose.msra.mxu0 0
    %613 = vmatprep.subr.bf16.mxu0 0
    %614 = vmatpush1.bf16.xpose.msra.mxu0 0
    %615 = vmatprep.subr.bf16.mxu0 0
    %616 = vmatpush1.bf16.xpose.msra.mxu0 0
    %617 = vmatprep.subr.bf16.mxu0 0
    %618 = vmatpush1.bf16.xpose.msra.mxu0 0
    %619 = vmatprep.subr.bf16.mxu0 0
    %620 = vmatpush1.bf16.xpose.msra.mxu0 0
    %621 = vmatprep.subr.bf16.mxu0 0
    %622 = vmatpush1.bf16.xpose.msra.mxu0 0
    %623 = vmatprep.subr.bf16.mxu0 0
    %624 = vmatpush1.bf16.xpose.msra.mxu0 0
    %625 = vmatprep.subr.bf16.mxu0 0
    %626 = vmatpush1.bf16.xpose.msra.mxu0 0
    %627 = vmatprep.subr.bf16.mxu0 0
    %628 = vmatpush1.bf16.xpose.msra.mxu0 0
    %629 = vmatprep.subr.bf16.mxu0 0
    %630 = vmatpush1.bf16.xpose.msra.mxu0 0
    %631 = vmatprep.subr.bf16.mxu0 0
    %632 = vmatpush1.bf16.xpose.msra.mxu0 0
    %633 = vmatprep.subr.bf16.mxu0 0
    %634 = vmatpush1.bf16.xpose.msra.mxu0 0
    %635 = vmatprep.subr.bf16.mxu0 0
    %636 = vmatpush1.bf16.xpose.msra.mxu0 0
    %637 = vmatprep.subr.bf16.mxu0 0
    %638 = vmatpush1.bf16.xpose.msra.mxu0 0
    %639 = vmatprep.subr.bf16.mxu0 0
    %640 = vmatpush1.bf16.xpose.msra.mxu0 0
    %641 = vmatprep.mubr.bf16.mxu0 0
    %642 = vmatmul.mubr.bf16.gmra.mrb[0].mxu0 %v604
    %v643 = vpop.f32.mrb[0].mxu0
    %v644 = vadd.f32 0.0, %v643
    %v645 = vpop.f32.mrb[0].mxu0
    %v646 = vpop.f32.mrb[0].mxu0
    %v647 = vpop.f32.mrb[0].mxu0
    %648 = vdwg.mxu0
    %649 = vrot.lane.b32.xlu0 %v551, 112
    %v650 = vpop.permute.xlu0 %649
    %651 = vrot.lane.b32.xlu0 %v552, 112
    %v652 = vpop.permute.xlu0 %651
    %v654 = vsel %vm352, %v650, 0
    %v657 = vsel %vm352, %v652, 0
    %659 = vmatprep.subr.bf16.mxu0 0
    %660 = vmatpush1.bf16.xpose.msra.mxu0 %v657
    %661 = vmatprep.subr.bf16.mxu0 0
    %662 = vmatpush1.bf16.xpose.msra.mxu0 0
    %663 = vmatprep.subr.bf16.mxu0 0
    %664 = vmatpush1.bf16.xpose.msra.mxu0 0
    %665 = vmatprep.subr.bf16.mxu0 0
    %666 = vmatpush1.bf16.xpose.msra.mxu0 0
    %667 = vmatprep.subr.bf16.mxu0 0
    %668 = vmatpush1.bf16.xpose.msra.mxu0 0
    %669 = vmatprep.subr.bf16.mxu0 0
    %670 = vmatpush1.bf16.xpose.msra.mxu0 0
    %671 = vmatprep.subr.bf16.mxu0 0
    %672 = vmatpush1.bf16.xpose.msra.mxu0 0
    %673 = vmatprep.subr.bf16.mxu0 0
    %674 = vmatpush1.bf16.xpose.msra.mxu0 0
    %675 = vmatprep.subr.bf16.mxu0 0
    %676 = vmatpush1.bf16.xpose.msra.mxu0 0
    %677 = vmatprep.subr.bf16.mxu0 0
    %678 = vmatpush1.bf16.xpose.msra.mxu0 0
    %679 = vmatprep.subr.bf16.mxu0 0
    %680 = vmatpush1.bf16.xpose.msra.mxu0 0
    %681 = vmatprep.subr.bf16.mxu0 0
    %682 = vmatpush1.bf16.xpose.msra.mxu0 0
    %683 = vmatprep.subr.bf16.mxu0 0
    %684 = vmatpush1.bf16.xpose.msra.mxu0 0
    %685 = vmatprep.subr.bf16.mxu0 0
    %686 = vmatpush1.bf16.xpose.msra.mxu0 0
    %687 = vmatprep.subr.bf16.mxu0 0
    %688 = vmatpush1.bf16.xpose.msra.mxu0 0
    %689 = vmatprep.subr.bf16.mxu0 0
    %690 = vmatpush1.bf16.xpose.msra.mxu0 0
    %691 = vmatprep.mubr.bf16.mxu0 0
    %692 = vmatmul.mubr.bf16.gmra.mrb[0].mxu0 %v654
    %v693 = vpop.f32.mrb[0].mxu0
    %v694 = vadd.f32 0.0, %v693
    %v695 = vpop.f32.mrb[0].mxu0
    %v696 = vpop.f32.mrb[0].mxu0
    %v697 = vpop.f32.mrb[0].mxu0
    %698 = vdwg.mxu0
    %699 = vrot.lane.b32.xlu0 %v551, 104
    %v700 = vpop.permute.xlu0 %699
    %701 = vrot.lane.b32.xlu0 %v552, 104
    %v702 = vpop.permute.xlu0 %701
    %v704 = vsel %vm352, %v700, 0
    %v707 = vsel %vm352, %v702, 0
    %709 = vmatprep.subr.bf16.mxu0 0
    %710 = vmatpush1.bf16.xpose.msra.mxu0 %v707
    %711 = vmatprep.subr.bf16.mxu0 0
    %712 = vmatpush1.bf16.xpose.msra.mxu0 0
    %713 = vmatprep.subr.bf16.mxu0 0
    %714 = vmatpush1.bf16.xpose.msra.mxu0 0
    %715 = vmatprep.subr.bf16.mxu0 0
    %716 = vmatpush1.bf16.xpose.msra.mxu0 0
    %717 = vmatprep.subr.bf16.mxu0 0
    %718 = vmatpush1.bf16.xpose.msra.mxu0 0
    %719 = vmatprep.subr.bf16.mxu0 0
    %720 = vmatpush1.bf16.xpose.msra.mxu0 0
    %721 = vmatprep.subr.bf16.mxu0 0
    %722 = vmatpush1.bf16.xpose.msra.mxu0 0
    %723 = vmatprep.subr.bf16.mxu0 0
    %724 = vmatpush1.bf16.xpose.msra.mxu0 0
    %725 = vmatprep.subr.bf16.mxu0 0
    %726 = vmatpush1.bf16.xpose.msra.mxu0 0
    %727 = vmatprep.subr.bf16.mxu0 0
    %728 = vmatpush1.bf16.xpose.msra.mxu0 0
    %729 = vmatprep.subr.bf16.mxu0 0
    %730 = vmatpush1.bf16.xpose.msra.mxu0 0
    %731 = vmatprep.subr.bf16.mxu0 0
    %732 = vmatpush1.bf16.xpose.msra.mxu0 0
    %733 = vmatprep.subr.bf16.mxu0 0
    %734 = vmatpush1.bf16.xpose.msra.mxu0 0
    %735 = vmatprep.subr.bf16.mxu0 0
    %736 = vmatpush1.bf16.xpose.msra.mxu0 0
    %737 = vmatprep.subr.bf16.mxu0 0
    %738 = vmatpush1.bf16.xpose.msra.mxu0 0
    %739 = vmatprep.subr.bf16.mxu0 0
    %740 = vmatpush1.bf16.xpose.msra.mxu0 0
    %741 = vmatprep.mubr.bf16.mxu0 0
    %742 = vmatmul.mubr.bf16.gmra.mrb[0].mxu0 %v704
    %v743 = vpop.f32.mrb[0].mxu0
    %v744 = vadd.f32 0.0, %v743
    %v745 = vpop.f32.mrb[0].mxu0
    %v746 = vpop.f32.mrb[0].mxu0
    %v747 = vpop.f32.mrb[0].mxu0
    %748 = vdwg.mxu0
    %vm749 = vcmp.eq.f32.partialorder %v350, 0.0
    %vm750 = vcmp.eq.f32.partialorder %v351, 0.0
    %v751 = vsel %vm749, -1e+09, %v394
    %v752 = vsel %vm749, -1e+09, %v446
    %v753 = vsel %vm749, -1e+09, %v496
    %v754 = vsel %vm749, -1e+09, %v546
    %v755 = vsel %vm750, -1e+09, %v594
    %v756 = vsel %vm750, -1e+09, %v644
    %v757 = vsel %vm750, -1e+09, %v694
    %v758 = vsel %vm750, -1e+09, %v744
    %v759 = vsel %vm352, %v751, -inf
    %760 = vmax.xlane.f32.xlu0 %v759
    %v761 = vpop.xlane.xlu0 %760
    %v762 = vsel %vm352, %v752, -inf
    %763 = vmax.xlane.f32.xlu0 %v762
    %v764 = vpop.xlane.xlu0 %763
    %v765 = vsel %vm352, %v753, -inf
    %766 = vmax.xlane.f32.xlu0 %v765
    %v767 = vpop.xlane.xlu0 %766
    %v768 = vsel %vm352, %v754, -inf
    %769 = vmax.xlane.f32.xlu0 %v768
    %v770 = vpop.xlane.xlu0 %769
    %v771 = vsel %vm352, %v755, -inf
    %772 = vmax.xlane.f32.xlu0 %v771
    %v773 = vpop.xlane.xlu0 %772
    %v774 = vsel %vm352, %v756, -inf
    %775 = vmax.xlane.f32.xlu0 %v774
    %v776 = vpop.xlane.xlu0 %775
    %v777 = vsel %vm352, %v757, -inf
    %778 = vmax.xlane.f32.xlu0 %v777
    %v779 = vpop.xlane.xlu0 %778
    %v780 = vsel %vm352, %v758, -inf
    %781 = vmax.xlane.f32.xlu0 %v780
    %v782 = vpop.xlane.xlu0 %781
    %v783 = vsub.f32 %v751, %v761
    %v784 = vsub.f32 %v752, %v764
    %v785 = vsub.f32 %v753, %v767
    %v786 = vsub.f32 %v754, %v770
    %v787 = vsub.f32 %v755, %v773
    %v788 = vsub.f32 %v756, %v776
    %v789 = vsub.f32 %v757, %v779
    %v790 = vsub.f32 %v758, %v782
    %v791 = vmul.f32 %v783, 1.442695
    %v792 = vpow.pop %v791
    %v793 = vmul.f32 %v784, 1.442695
    %v794 = vpow.pop %v793
    %v795 = vmul.f32 %v785, 1.442695
    %v796 = vpow.pop %v795
    %v797 = vmul.f32 %v786, 1.442695
    %v798 = vpow.pop %v797
    %v799 = vmul.f32 %v787, 1.442695
    %v800 = vpow.pop %v799
    %v801 = vmul.f32 %v788, 1.442695
    %v802 = vpow.pop %v801
    %v803 = vmul.f32 %v789, 1.442695
    %v804 = vpow.pop %v803
    %v805 = vmul.f32 %v790, 1.442695
    %v806 = vpow.pop %v805
    %v807 = vsel %vm352, %v792, 0.0
    %808 = vadd.xlane.f32.xlu0 %v807
    %v809 = vpop.xlane.xlu0 %808
    %v810 = vsel %vm352, %v794, 0.0
    %811 = vadd.xlane.f32.xlu0 %v810
    %v812 = vpop.xlane.xlu0 %811
    %v813 = vsel %vm352, %v796, 0.0
    %814 = vadd.xlane.f32.xlu0 %v813
    %v815 = vpop.xlane.xlu0 %814
    %v816 = vsel %vm352, %v798, 0.0
    %817 = vadd.xlane.f32.xlu0 %v816
    %v818 = vpop.xlane.xlu0 %817
    %v819 = vsel %vm352, %v800, 0.0
    %820 = vadd.xlane.f32.xlu0 %v819
    %v821 = vpop.xlane.xlu0 %820
    %v822 = vsel %vm352, %v802, 0.0
    %823 = vadd.xlane.f32.xlu0 %v822
    %v824 = vpop.xlane.xlu0 %823
    %v825 = vsel %vm352, %v804, 0.0
    %826 = vadd.xlane.f32.xlu0 %v825
    %v827 = vpop.xlane.xlu0 %826
    %v828 = vsel %vm352, %v806, 0.0
    %829 = vadd.xlane.f32.xlu0 %v828
    %v830 = vpop.xlane.xlu0 %829
    %v831 = vrcp.pop %v809
    %v832 = vrcp.pop %v812
    %v833 = vrcp.pop %v815
    %v834 = vrcp.pop %v818
    %v835 = vrcp.pop %v821
    %v836 = vrcp.pop %v824
    %v837 = vrcp.pop %v827
    %v838 = vrcp.pop %v830
    %v839 = vmul.f32 %v792, %v831
    %v840 = vmul.f32 %v794, %v832
    %v841 = vmul.f32 %v796, %v833
    %v842 = vmul.f32 %v798, %v834
    %v843 = vmul.f32 %v800, %v835
    %v844 = vmul.f32 %v802, %v836
    %v845 = vmul.f32 %v804, %v837
    %v846 = vmul.f32 %v806, %v838
    %v847 = vpack.c.bf16 %v840, %v839
    %v848 = vpack.c.bf16 %v842, %v841
    %v849 = vpack.c.bf16 %v844, %v843
    %v850 = vpack.c.bf16 %v846, %v845
    %v852 = vsel %vm352, %v847, 0
    %vm854 = vcmask 1043456
    %v856 = vsel %vm854, %v349, 0
    %858 = vmatprep.subr.bf16.mxu0 0
    %859 = vmatpush1.bf16.msra.mxu0 %v856
    %860 = vmatprep.subr.bf16.mxu0 0
    %861 = vmatpush1.bf16.msra.mxu0 0
    %862 = vmatprep.subr.bf16.mxu0 0
    %863 = vmatpush1.bf16.msra.mxu0 0
    %864 = vmatprep.subr.bf16.mxu0 0
    %865 = vmatpush1.bf16.msra.mxu0 0
    %866 = vmatprep.subr.bf16.mxu0 0
    %867 = vmatpush1.bf16.msra.mxu0 0
    %868 = vmatprep.subr.bf16.mxu0 0
    %869 = vmatpush1.bf16.msra.mxu0 0
    %870 = vmatprep.subr.bf16.mxu0 0
    %871 = vmatpush1.bf16.msra.mxu0 0
    %872 = vmatprep.subr.bf16.mxu0 0
    %873 = vmatpush1.bf16.msra.mxu0 0
    %874 = vmatprep.subr.bf16.mxu0 0
    %875 = vmatpush1.bf16.msra.mxu0 0
    %876 = vmatprep.subr.bf16.mxu0 0
    %877 = vmatpush1.bf16.msra.mxu0 0
    %878 = vmatprep.subr.bf16.mxu0 0
    %879 = vmatpush1.bf16.msra.mxu0 0
    %880 = vmatprep.subr.bf16.mxu0 0
    %881 = vmatpush1.bf16.msra.mxu0 0
    %882 = vmatprep.subr.bf16.mxu0 0
    %883 = vmatpush1.bf16.msra.mxu0 0
    %884 = vmatprep.subr.bf16.mxu0 0
    %885 = vmatpush1.bf16.msra.mxu0 0
    %886 = vmatprep.subr.bf16.mxu0 0
    %887 = vmatpush1.bf16.msra.mxu0 0
    %888 = vmatprep.subr.bf16.mxu0 0
    %889 = vmatpush1.bf16.msra.mxu0 0
    %890 = vmatprep.mubr.bf16.mxu0 0
    %891 = vmatmul.mubr.bf16.gmra.mrb[0].mxu0 %v852
    %v892 = vpop.f32.mrb[0].mxu0
    %v893 = vadd.f32 0.0, %v892
    %v894 = vpop.f32.mrb[0].mxu0
    %v895 = vpop.f32.mrb[0].mxu0
    %v896 = vpop.f32.mrb[0].mxu0
    %897 = vdwg.mxu0
    %v899 = vrot.slane %v847, 4
    %901 = vrot.lane.b32.xlu0 %v349, 120
    %v902 = vpop.permute.xlu0 %901
    %v904 = vsel %vm352, %v899, 0
    %v907 = vsel %vm854, %v902, 0
    %909 = vmatprep.subr.bf16.mxu0 0
    %910 = vmatpush1.bf16.msra.mxu0 %v907
    %911 = vmatprep.subr.bf16.mxu0 0
    %912 = vmatpush1.bf16.msra.mxu0 0
    %913 = vmatprep.subr.bf16.mxu0 0
    %914 = vmatpush1.bf16.msra.mxu0 0
    %915 = vmatprep.subr.bf16.mxu0 0
    %916 = vmatpush1.bf16.msra.mxu0 0
    %917 = vmatprep.subr.bf16.mxu0 0
    %918 = vmatpush1.bf16.msra.mxu0 0
    %919 = vmatprep.subr.bf16.mxu0 0
    %920 = vmatpush1.bf16.msra.mxu0 0
    %921 = vmatprep.subr.bf16.mxu0 0
    %922 = vmatpush1.bf16.msra.mxu0 0
    %923 = vmatprep.subr.bf16.mxu0 0
    %924 = vmatpush1.bf16.msra.mxu0 0
    %925 = vmatprep.subr.bf16.mxu0 0
    %926 = vmatpush1.bf16.msra.mxu0 0
    %927 = vmatprep.subr.bf16.mxu0 0
    %928 = vmatpush1.bf16.msra.mxu0 0
    %929 = vmatprep.subr.bf16.mxu0 0
    %930 = vmatpush1.bf16.msra.mxu0 0
    %931 = vmatprep.subr.bf16.mxu0 0
    %932 = vmatpush1.bf16.msra.mxu0 0
    %933 = vmatprep.subr.bf16.mxu0 0
    %934 = vmatpush1.bf16.msra.mxu0 0
    %935 = vmatprep.subr.bf16.mxu0 0
    %936 = vmatpush1.bf16.msra.mxu0 0
    %937 = vmatprep.subr.bf16.mxu0 0
    %938 = vmatpush1.bf16.msra.mxu0 0
    %939 = vmatprep.subr.bf16.mxu0 0
    %940 = vmatpush1.bf16.msra.mxu0 0
    %941 = vmatprep.mubr.bf16.mxu0 0
    %942 = vmatmul.mubr.bf16.gmra.mrb[0].mxu0 %v904
    %v943 = vpop.f32.mrb[0].mxu0
    %v944 = vadd.f32 0.0, %v943
    %v945 = vpop.f32.mrb[0].mxu0
    %v946 = vpop.f32.mrb[0].mxu0
    %v947 = vpop.f32.mrb[0].mxu0
    %948 = vdwg.mxu0
    %949 = vrot.lane.b32.xlu0 %v349, 112
    %v950 = vpop.permute.xlu0 %949
    %v952 = vsel %vm352, %v848, 0
    %v955 = vsel %vm854, %v950, 0
    %957 = vmatprep.subr.bf16.mxu0 0
    %958 = vmatpush1.bf16.msra.mxu0 %v955
    %959 = vmatprep.subr.bf16.mxu0 0
    %960 = vmatpush1.bf16.msra.mxu0 0
    %961 = vmatprep.subr.bf16.mxu0 0
    %962 = vmatpush1.bf16.msra.mxu0 0
    %963 = vmatprep.subr.bf16.mxu0 0
    %964 = vmatpush1.bf16.msra.mxu0 0
    %965 = vmatprep.subr.bf16.mxu0 0
    %966 = vmatpush1.bf16.msra.mxu0 0
    %967 = vmatprep.subr.bf16.mxu0 0
    %968 = vmatpush1.bf16.msra.mxu0 0
    %969 = vmatprep.subr.bf16.mxu0 0
    %970 = vmatpush1.bf16.msra.mxu0 0
    %971 = vmatprep.subr.bf16.mxu0 0
    %972 = vmatpush1.bf16.msra.mxu0 0
    %973 = vmatprep.subr.bf16.mxu0 0
    %974 = vmatpush1.bf16.msra.mxu0 0
    %975 = vmatprep.subr.bf16.mxu0 0
    %976 = vmatpush1.bf16.msra.mxu0 0
    %977 = vmatprep.subr.bf16.mxu0 0
    %978 = vmatpush1.bf16.msra.mxu0 0
    %979 = vmatprep.subr.bf16.mxu0 0
    %980 = vmatpush1.bf16.msra.mxu0 0
    %981 = vmatprep.subr.bf16.mxu0 0
    %982 = vmatpush1.bf16.msra.mxu0 0
    %983 = vmatprep.subr.bf16.mxu0 0
    %984 = vmatpush1.bf16.msra.mxu0 0
    %985 = vmatprep.subr.bf16.mxu0 0
    %986 = vmatpush1.bf16.msra.mxu0 0
    %987 = vmatprep.subr.bf16.mxu0 0
    %988 = vmatpush1.bf16.msra.mxu0 0
    %989 = vmatprep.mubr.bf16.mxu0 0
    %990 = vmatmul.mubr.bf16.gmra.mrb[0].mxu0 %v952
    %v991 = vpop.f32.mrb[0].mxu0
    %v992 = vadd.f32 0.0, %v991
    %v993 = vpop.f32.mrb[0].mxu0
    %v994 = vpop.f32.mrb[0].mxu0
    %v995 = vpop.f32.mrb[0].mxu0
    %996 = vdwg.mxu0
    %v998 = vrot.slane %v848, 4
    %999 = vrot.lane.b32.xlu0 %v349, 104
    %v1000 = vpop.permute.xlu0 %999
    %v1002 = vsel %vm352, %v998, 0
    %v1005 = vsel %vm854, %v1000, 0
    %1007 = vmatprep.subr.bf16.mxu0 0
    %1008 = vmatpush1.bf16.msra.mxu0 %v1005
    %1009 = vmatprep.subr.bf16.mxu0 0
    %1010 = vmatpush1.bf16.msra.mxu0 0
    %1011 = vmatprep.subr.bf16.mxu0 0
    %1012 = vmatpush1.bf16.msra.mxu0 0
    %1013 = vmatprep.subr.bf16.mxu0 0
    %1014 = vmatpush1.bf16.msra.mxu0 0
    %1015 = vmatprep.subr.bf16.mxu0 0
    %1016 = vmatpush1.bf16.msra.mxu0 0
    %1017 = vmatprep.subr.bf16.mxu0 0
    %1018 = vmatpush1.bf16.msra.mxu0 0
    %1019 = vmatprep.subr.bf16.mxu0 0
    %1020 = vmatpush1.bf16.msra.mxu0 0
    %1021 = vmatprep.subr.bf16.mxu0 0
    %1022 = vmatpush1.bf16.msra.mxu0 0
    %1023 = vmatprep.subr.bf16.mxu0 0
    %1024 = vmatpush1.bf16.msra.mxu0 0
    %1025 = vmatprep.subr.bf16.mxu0 0
    %1026 = vmatpush1.bf16.msra.mxu0 0
    %1027 = vmatprep.subr.bf16.mxu0 0
    %1028 = vmatpush1.bf16.msra.mxu0 0
    %1029 = vmatprep.subr.bf16.mxu0 0
    %1030 = vmatpush1.bf16.msra.mxu0 0
    %1031 = vmatprep.subr.bf16.mxu0 0
    %1032 = vmatpush1.bf16.msra.mxu0 0
    %1033 = vmatprep.subr.bf16.mxu0 0
    %1034 = vmatpush1.bf16.msra.mxu0 0
    %1035 = vmatprep.subr.bf16.mxu0 0
    %1036 = vmatpush1.bf16.msra.mxu0 0
    %1037 = vmatprep.subr.bf16.mxu0 0
    %1038 = vmatpush1.bf16.msra.mxu0 0
    %1039 = vmatprep.mubr.bf16.mxu0 0
    %1040 = vmatmul.mubr.bf16.gmra.mrb[0].mxu0 %v1002
    %v1041 = vpop.f32.mrb[0].mxu0
    %v1042 = vadd.f32 0.0, %v1041
    %v1043 = vpop.f32.mrb[0].mxu0
    %v1044 = vpop.f32.mrb[0].mxu0
    %v1045 = vpop.f32.mrb[0].mxu0
    %1046 = vdwg.mxu0
    %1048 = vrot.lane.b32.xlu0 %v944, 8
    %v1049 = vpop.permute.xlu0 %1048
    %1052 = vrot.lane.b32.xlu0 %v992, 16
    %v1053 = vpop.permute.xlu0 %1052
    %1056 = vrot.lane.b32.xlu0 %v1042, 24
    %v1057 = vpop.permute.xlu0 %1056
    %v1059 = vsel %vm352, %v893, %v1049
    %vm1060 = vcmask 130048
    %v1061 = vsel %vm1060, %v1059, %v1053
    %vm1062 = vcmask 195584
    %v1063 = vsel %vm1062, %v1061, %v1057
    %v1064 = vrot.slane %v349, 4
    %v1066 = vsel %vm352, %v849, 0
    %v1069 = vsel %vm854, %v1064, 0
    %1071 = vmatprep.subr.bf16.mxu0 0
    %1072 = vmatpush1.bf16.msra.mxu0 %v1069
    %1073 = vmatprep.subr.bf16.mxu0 0
    %1074 = vmatpush1.bf16.msra.mxu0 0
    %1075 = vmatprep.subr.bf16.mxu0 0
    %1076 = vmatpush1.bf16.msra.mxu0 0
    %1077 = vmatprep.subr.bf16.mxu0 0
    %1078 = vmatpush1.bf16.msra.mxu0 0
    %1079 = vmatprep.subr.bf16.mxu0 0
    %1080 = vmatpush1.bf16.msra.mxu0 0
    %1081 = vmatprep.subr.bf16.mxu0 0
    %1082 = vmatpush1.bf16.msra.mxu0 0
    %1083 = vmatprep.subr.bf16.mxu0 0
    %1084 = vmatpush1.bf16.msra.mxu0 0
    %1085 = vmatprep.subr.bf16.mxu0 0
    %1086 = vmatpush1.bf16.msra.mxu0 0
    %1087 = vmatprep.subr.bf16.mxu0 0
    %1088 = vmatpush1.bf16.msra.mxu0 0
    %1089 = vmatprep.subr.bf16.mxu0 0
    %1090 = vmatpush1.bf16.msra.mxu0 0
    %1091 = vmatprep.subr.bf16.mxu0 0
    %1092 = vmatpush1.bf16.msra.mxu0 0
    %1093 = vmatprep.subr.bf16.mxu0 0
    %1094 = vmatpush1.bf16.msra.mxu0 0
    %1095 = vmatprep.subr.bf16.mxu0 0
    %1096 = vmatpush1.bf16.msra.mxu0 0
    %1097 = vmatprep.subr.bf16.mxu0 0
    %1098 = vmatpush1.bf16.msra.mxu0 0
    %1099 = vmatprep.subr.bf16.mxu0 0
    %1100 = vmatpush1.bf16.msra.mxu0 0
    %1101 = vmatprep.subr.bf16.mxu0 0
    %1102 = vmatpush1.bf16.msra.mxu0 0
    %1103 = vmatprep.mubr.bf16.mxu0 0
    %1104 = vmatmul.mubr.bf16.gmra.mrb[0].mxu0 %v1066
    %v1105 = vpop.f32.mrb[0].mxu0
    %v1106 = vadd.f32 0.0, %v1105
    %v1107 = vpop.f32.mrb[0].mxu0
    %v1108 = vpop.f32.mrb[0].mxu0
    %v1109 = vpop.f32.mrb[0].mxu0
    %1110 = vdwg.mxu0
    %v1112 = vrot.slane %v849, 4
    %1113 = vrot.lane.b32.xlu0 %v1064, 120
    %v1114 = vpop.permute.xlu0 %1113
    %v1116 = vsel %vm352, %v1112, 0
    %v1119 = vsel %vm854, %v1114, 0
    %1121 = vmatprep.subr.bf16.mxu0 0
    %1122 = vmatpush1.bf16.msra.mxu0 %v1119
    %1123 = vmatprep.subr.bf16.mxu0 0
    %1124 = vmatpush1.bf16.msra.mxu0 0
    %1125 = vmatprep.subr.bf16.mxu0 0
    %1126 = vmatpush1.bf16.msra.mxu0 0
    %1127 = vmatprep.subr.bf16.mxu0 0
    %1128 = vmatpush1.bf16.msra.mxu0 0
    %1129 = vmatprep.subr.bf16.mxu0 0
    %1130 = vmatpush1.bf16.msra.mxu0 0
    %1131 = vmatprep.subr.bf16.mxu0 0
    %1132 = vmatpush1.bf16.msra.mxu0 0
    %1133 = vmatprep.subr.bf16.mxu0 0
    %1134 = vmatpush1.bf16.msra.mxu0 0
    %1135 = vmatprep.subr.bf16.mxu0 0
    %1136 = vmatpush1.bf16.msra.mxu0 0
    %1137 = vmatprep.subr.bf16.mxu0 0
    %1138 = vmatpush1.bf16.msra.mxu0 0
    %1139 = vmatprep.subr.bf16.mxu0 0
    %1140 = vmatpush1.bf16.msra.mxu0 0
    %1141 = vmatprep.subr.bf16.mxu0 0
    %1142 = vmatpush1.bf16.msra.mxu0 0
    %1143 = vmatprep.subr.bf16.mxu0 0
    %1144 = vmatpush1.bf16.msra.mxu0 0
    %1145 = vmatprep.subr.bf16.mxu0 0
    %1146 = vmatpush1.bf16.msra.mxu0 0
    %1147 = vmatprep.subr.bf16.mxu0 0
    %1148 = vmatpush1.bf16.msra.mxu0 0
    %1149 = vmatprep.subr.bf16.mxu0 0
    %1150 = vmatpush1.bf16.msra.mxu0 0
    %1151 = vmatprep.subr.bf16.mxu0 0
    %1152 = vmatpush1.bf16.msra.mxu0 0
    %1153 = vmatprep.mubr.bf16.mxu0 0
    %1154 = vmatmul.mubr.bf16.gmra.mrb[0].mxu0 %v1116
    %v1155 = vpop.f32.mrb[0].mxu0
    %v1156 = vadd.f32 0.0, %v1155
    %v1157 = vpop.f32.mrb[0].mxu0
    %v1158 = vpop.f32.mrb[0].mxu0
    %v1159 = vpop.f32.mrb[0].mxu0
    %1160 = vdwg.mxu0
    %1161 = vrot.lane.b32.xlu0 %v1064, 112
    %v1162 = vpop.permute.xlu0 %1161
    %v1164 = vsel %vm352, %v850, 0
    %v1167 = vsel %vm854, %v1162, 0
    %1169 = vmatprep.subr.bf16.mxu0 0
    %1170 = vmatpush1.bf16.msra.mxu0 %v1167
    %1171 = vmatprep.subr.bf16.mxu0 0
    %1172 = vmatpush1.bf16.msra.mxu0 0
    %1173 = vmatprep.subr.bf16.mxu0 0
    %1174 = vmatpush1.bf16.msra.mxu0 0
    %1175 = vmatprep.subr.bf16.mxu0 0
    %1176 = vmatpush1.bf16.msra.mxu0 0
    %1177 = vmatprep.subr.bf16.mxu0 0
    %1178 = vmatpush1.bf16.msra.mxu0 0
    %1179 = vmatprep.subr.bf16.mxu0 0
    %1180 = vmatpush1.bf16.msra.mxu0 0
    %1181 = vmatprep.subr.bf16.mxu0 0
    %1182 = vmatpush1.bf16.msra.mxu0 0
    %1183 = vmatprep.subr.bf16.mxu0 0
    %1184 = vmatpush1.bf16.msra.mxu0 0
    %1185 = vmatprep.subr.bf16.mxu0 0
    %1186 = vmatpush1.bf16.msra.mxu0 0
    %1187 = vmatprep.subr.bf16.mxu0 0
    %1188 = vmatpush1.bf16.msra.mxu0 0
    %1189 = vmatprep.subr.bf16.mxu0 0
    %1190 = vmatpush1.bf16.msra.mxu0 0
    %1191 = vmatprep.subr.bf16.mxu0 0
    %1192 = vmatpush1.bf16.msra.mxu0 0
    %1193 = vmatprep.subr.bf16.mxu0 0
    %1194 = vmatpush1.bf16.msra.mxu0 0
    %1195 = vmatprep.subr.bf16.mxu0 0
    %1196 = vmatpush1.bf16.msra.mxu0 0
    %1197 = vmatprep.subr.bf16.mxu0 0
    %1198 = vmatpush1.bf16.msra.mxu0 0
    %1199 = vmatprep.subr.bf16.mxu0 0
    %1200 = vmatpush1.bf16.msra.mxu0 0
    %1201 = vmatprep.mubr.bf16.mxu0 0
    %1202 = vmatmul.mubr.bf16.gmra.mrb[0].mxu0 %v1164
    %v1203 = vpop.f32.mrb[0].mxu0
    %v1204 = vadd.f32 0.0, %v1203
    %v1205 = vpop.f32.mrb[0].mxu0
    %v1206 = vpop.f32.mrb[0].mxu0
    %v1207 = vpop.f32.mrb[0].mxu0
    %1208 = vdwg.mxu0
    %v1210 = vrot.slane %v850, 4
    %1211 = vrot.lane.b32.xlu0 %v1064, 104
    %v1212 = vpop.permute.xlu0 %1211
    %v1214 = vsel %vm352, %v1210, 0
    %v1217 = vsel %vm854, %v1212, 0
    %1219 = vmatprep.subr.bf16.mxu0 0
    %1220 = vmatpush1.bf16.msra.mxu0 %v1217
    %1221 = vmatprep.subr.bf16.mxu0 0
    %1222 = vmatpush1.bf16.msra.mxu0 0
    %1223 = vmatprep.subr.bf16.mxu0 0
    %1224 = vmatpush1.bf16.msra.mxu0 0
    %1225 = vmatprep.subr.bf16.mxu0 0
    %1226 = vmatpush1.bf16.msra.mxu0 0
    %1227 = vmatprep.subr.bf16.mxu0 0
    %1228 = vmatpush1.bf16.msra.mxu0 0
    %1229 = vmatprep.subr.bf16.mxu0 0
    %1230 = vmatpush1.bf16.msra.mxu0 0
    %1231 = vmatprep.subr.bf16.mxu0 0
    %1232 = vmatpush1.bf16.msra.mxu0 0
    %1233 = vmatprep.subr.bf16.mxu0 0
    %1234 = vmatpush1.bf16.msra.mxu0 0
    %1235 = vmatprep.subr.bf16.mxu0 0
    %1236 = vmatpush1.bf16.msra.mxu0 0
    %1237 = vmatprep.subr.bf16.mxu0 0
    %1238 = vmatpush1.bf16.msra.mxu0 0
    %1239 = vmatprep.subr.bf16.mxu0 0
    %1240 = vmatpush1.bf16.msra.mxu0 0
    %1241 = vmatprep.subr.bf16.mxu0 0
    %1242 = vmatpush1.bf16.msra.mxu0 0
    %1243 = vmatprep.subr.bf16.mxu0 0
    %1244 = vmatpush1.bf16.msra.mxu0 0
    %1245 = vmatprep.subr.bf16.mxu0 0
    %1246 = vmatpush1.bf16.msra.mxu0 0
    %1247 = vmatprep.subr.bf16.mxu0 0
    %1248 = vmatpush1.bf16.msra.mxu0 0
    %1249 = vmatprep.subr.bf16.mxu0 0
    %1250 = vmatpush1.bf16.msra.mxu0 0
    %1251 = vmatprep.mubr.bf16.mxu0 0
    %1252 = vmatmul.mubr.bf16.gmra.mrb[0].mxu0 %v1214
    %v1253 = vpop.f32.mrb[0].mxu0
    %v1254 = vadd.f32 0.0, %v1253
    %v1255 = vpop.f32.mrb[0].mxu0
    %v1256 = vpop.f32.mrb[0].mxu0
    %v1257 = vpop.f32.mrb[0].mxu0
    %1258 = vdwg.mxu0
    %1260 = vrot.lane.b32.xlu0 %v1156, 8
    %v1261 = vpop.permute.xlu0 %1260
    %1264 = vrot.lane.b32.xlu0 %v1204, 16
    %v1265 = vpop.permute.xlu0 %1264
    %1268 = vrot.lane.b32.xlu0 %v1254, 24
    %v1269 = vpop.permute.xlu0 %1268
    %v1271 = vsel %vm352, %v1106, %v1261
    %v1272 = vsel %vm1060, %v1271, %v1265
    %v1273 = vsel %vm1062, %v1272, %v1269
    %v1274 = vpack.c.bf16 %v1273, %v1063
    %v1275 = vld [vmem:[%s10] sm:$0xf]
    %v1276 = vld [vmem:[%s10 + $0x4] sm:$0xf]
    %v1277 = vld [vmem:[%s10 + $0x8] sm:$0xf]
    %v1278 = vld [vmem:[%s10 + $0xc] sm:$0xf]
    %v1279 = vld [vmem:[%s11] sm:$0x1]
    %v1281 = vlaneseq
    %v1282 = vshrl.u32 %v1281, 7
    %v1283 = vsub.s32 0, %v1282
    %v1284 = vrot.slane %v1279, %v1283
    %v1290 = vunpack.c.l.b16 %v1275
    %v1291 = vunpack.c.l.b16 %v1276
    %v1292 = vunpack.c.l.b16 %v1277
    %v1293 = vunpack.c.l.b16 %v1278
    %v1294 = vpack.c.b16 %v1291, %v1290
    %v1295 = vpack.c.b16 %v1293, %v1292
    %v1299 = vsel %vm168, %v1274, 0
    %1301 = vmatprep.subr.bf16.mxu0 0
    %1302 = vmatpush1.bf16.msra.mxu0 %v1294
    %1303 = vmatprep.subr.bf16.mxu0 0
    %1304 = vmatpush1.bf16.msra.mxu0 %v1295
    %1305 = vmatprep.subr.bf16.mxu0 0
    %1306 = vmatpush1.bf16.msra.mxu0 0
    %1307 = vmatprep.subr.bf16.mxu0 0
    %1308 = vmatpush1.bf16.msra.mxu0 0
    %1309 = vmatprep.subr.bf16.mxu0 0
    %1310 = vmatpush1.bf16.msra.mxu0 0
    %1311 = vmatprep.subr.bf16.mxu0 0
    %1312 = vmatpush1.bf16.msra.mxu0 0
    %1313 = vmatprep.subr.bf16.mxu0 0
    %1314 = vmatpush1.bf16.msra.mxu0 0
    %1315 = vmatprep.subr.bf16.mxu0 0
    %1316 = vmatpush1.bf16.msra.mxu0 0
    %1317 = vmatprep.subr.bf16.mxu0 0
    %1318 = vmatpush1.bf16.msra.mxu0 0
    %1319 = vmatprep.subr.bf16.mxu0 0
    %1320 = vmatpush1.bf16.msra.mxu0 0
    %1321 = vmatprep.subr.bf16.mxu0 0
    %1322 = vmatpush1.bf16.msra.mxu0 0
    %1323 = vmatprep.subr.bf16.mxu0 0
    %1324 = vmatpush1.bf16.msra.mxu0 0
    %1325 = vmatprep.subr.bf16.mxu0 0
    %1326 = vmatpush1.bf16.msra.mxu0 0
    %1327 = vmatprep.subr.bf16.mxu0 0
    %1328 = vmatpush1.bf16.msra.mxu0 0
    %1329 = vmatprep.subr.bf16.mxu0 0
    %1330 = vmatpush1.bf16.msra.mxu0 0
    %1331 = vmatprep.subr.bf16.mxu0 0
    %1332 = vmatpush1.bf16.msra.mxu0 0
    %1333 = vmatprep.mubr.bf16.mxu0 0
    %1334 = vmatmul.mubr.bf16.gmra.mrb[0].mxu0 %v1299
    %v1335 = vpop.f32.mrb[0].mxu0
    %v1336 = vadd.f32 %v1284, %v1335
    %v1337 = vpop.f32.mrb[0].mxu0
    %v1338 = vpop.f32.mrb[0].mxu0
    %v1339 = vadd.f32 %v1284, %v1338
    %v1340 = vpop.f32.mrb[0].mxu0
    %1341 = vdwg.mxu0
    %1342 = vst.msk [vmem:[#allocation14] sm:$0xff] %vm168, %v1336
    %1343 = vst.msk [vmem:[#allocation14 + $0x8] sm:$0xff] %vm168, %v1339
    // Predicated region
    $region78: #{tpu_custom_call.1} parent=1 // pred_check
      _
    $region79: #{tpu_custom_call.1} parent=1 // pred_check_branch
      %1345 = sbr.rel (0) target = $region81
    $region80: #{tpu_custom_call.1} parent=1 // pred_region
      %s1347 = ssub.s32 256, 256
      %1348 = vsyncadd [#allocation4], %s1347
      %s1349 = sshll.u32 [#allocation14], 4
      %s1350 = int_to_ptr.vmem [resolvable:$true] %s1349
      %1355 = dma.vmem_to_hbm [thread:$0]  %s1350, 256, %s12, [#allocation4], 128, 128, 8
    $region81: #{tpu_custom_call.1} parent=1 // pred_fallthru
      _
    // Predicated region
    $region82: #{tpu_custom_call.1} parent=1 // pred_check
      _
    $region83: #{tpu_custom_call.1} parent=1 // pred_check_branch
      %1357 = sbr.rel (0) target = $region85
    $region84: #{tpu_custom_call.1} parent=1 // pred_region
      %1358 = dma.done [#allocation4], 256
    $region85: #{tpu_custom_call.1} parent=1 // pred_fallthru
      _
    %1359 = vsyncpa [#allocation3], 1
    %1360 = vsyncpa [#allocation6], 1
    %1361 = vsyncpa [#allocation9], 1
    %1362 = vsyncpa [#allocation12], 1
    %1363 = vsyncpa [#allocation4], 1

</llo_original>
